<compile_context>
chip_gen: v5e
topology: v5e:2x2
jax: 0.10.0
libtpu: 0.0.40
codegen_flags: <defaults>
</compile_context>

<pallas_src>
import functools

import jax
import jax.numpy as jnp
from jax.experimental import pallas as pl
from jax.experimental.pallas import tpu as pltpu


def llama2_block_kernel(x_ref, cos_ref, sin_ref, g1_ref, g2_ref,
                        wqkv_ref, wo_ref, w13_ref, w2_ref, out_ref,
                        *, num_heads, d_ff, seq_len, seqs_per_block):
    """One row tile (= `seqs_per_block` complete sequences) per grid step."""
    TM, D = x_ref.shape
    H = num_heads
    S = seq_len
    nseq = seqs_per_block
    hd = D // H
    eps = 1e-6

    x = x_ref[...].astype(jnp.float32)                       # (TM, D); f32 VPU math

    def rmsnorm(v, gamma_ref):
        ms = jnp.mean(v * v, axis=-1, keepdims=True)
        return v * jax.lax.rsqrt(ms + eps) * gamma_ref[...]   # gamma: (1, D) broadcast

    # ---------------- attention sub-block ----------------
    residual = x
    xn = rmsnorm(x, g1_ref)

    # Fused QKV projection: bf16 operands, f32 MXU accumulation.  (TM, 3D)
    qkv = jnp.dot(xn.astype(jnp.bfloat16), wqkv_ref[...],
                  preferred_element_type=jnp.float32)

    def to_heads(base):
        # Lane slice per head + leading-axis concat -> head-major (H*nseq, S, hd).
        return jnp.concatenate(
            [qkv[:, base + h * hd: base + (h + 1) * hd].reshape(nseq, S, hd)
             for h in range(H)], axis=0)

    q = to_heads(0)
    k = to_heads(D)
    v = to_heads(2 * D)

    cos = cos_ref[...]                      # (S, hd); broadcasts over the head/seq batch
    sin_s = sin_ref[...]                    # sign-folded sin (first half negated)

    def rope(t):
        # rotate_half's negation lives in sin_s, so this is just a half-swap * table.
        # TODO(synk): with lane-aligned head_dim (>=128, real Llama) replace the
        #             slice+concat with a single pltpu.roll in the XLU slot.
        rot = jnp.concatenate([t[..., hd // 2:], t[..., :hd // 2]], axis=-1)
        return t * cos + rot * sin_s

    scale = 1.0 / jnp.sqrt(jnp.float32(hd))
    q = rope(q) * scale                     # fold softmax scale into q (S*hd elements)
    k = rope(k)

    # Causal additive mask generated in-kernel (no HBM traffic, no VMEM buffer).
    # TODO(synk): restore a mask input if non-causal masks are ever required.
    row = jax.lax.broadcasted_iota(jnp.int32, (S, S), 0)
    col = jax.lax.broadcasted_iota(jnp.int32, (S, S), 1)
    mask = jnp.where(row >= col, 0.0, -1e9).astype(jnp.float32)

    scores = jnp.einsum("bqd,bkd->bqk",
                        q.astype(jnp.bfloat16), k.astype(jnp.bfloat16),
                        preferred_element_type=jnp.float32) + mask        # (H*nseq, S, S)
    m = jnp.max(scores, axis=-1, keepdims=True)
    p = jnp.exp(scores - m)
    l = jnp.sum(p, axis=-1, keepdims=True)
    # Causal mask guarantees l >= 1, so the approximate (EUP) reciprocal is safe here.
    attn = p * pl.reciprocal(l, approx=True)
    ctx = jnp.einsum("bqk,bkd->bqd",
                     attn.astype(jnp.bfloat16), v.astype(jnp.bfloat16),
                     preferred_element_type=jnp.float32)                  # (H*nseq, S, hd)

    # Regroup heads back onto lanes -> (TM, D), then ONE full-depth output projection.
    ctx2d = jnp.concatenate(
        [ctx[h * nseq:(h + 1) * nseq].reshape(TM, hd) for h in range(H)], axis=-1)
    proj = jnp.dot(ctx2d.astype(jnp.bfloat16), wo_ref[...],
                   preferred_element_type=jnp.float32)                    # (TM, D)
    x1 = residual + proj

    # ---------------- SwiGLU feed-forward sub-block ----------------
    residual2 = x1
    xn2 = rmsnorm(x1, g2_ref)
    h13 = jnp.dot(xn2.astype(jnp.bfloat16), w13_ref[...],
                  preferred_element_type=jnp.float32)                     # (TM, 2*d_ff)
    h1 = h13[:, :d_ff]
    h3 = h13[:, d_ff:]
    # SiLU with a single EUP op: sigmoid(x) == 0.5 * (1 + tanh(0.5 * x)).
    silu = h1 * (0.5 * (1.0 + jnp.tanh(0.5 * h1)))
    ffn = jnp.dot((silu * h3).astype(jnp.bfloat16), w2_ref[...],
                  preferred_element_type=jnp.float32)                     # (TM, D)

    out_ref[...] = (ffn + residual2).astype(out_ref.dtype)
    # TODO(synk): dropout (p=0.1) is a no-op here (inference semantics).


def llama2_block(x, mask, cos, sin, params, *, num_heads):
    """`mask` is accepted for API parity with the PyTorch forward but is assumed to be
    the standard causal mask (rebuilt in-kernel from iota).  cos/sin: RoPE tables (S, hd)."""
    del mask
    B, S, D = x.shape
    assert D % num_heads == 0, "d_model must be divisible by num_heads"
    hd = D // num_heads
    assert hd % 2 == 0, "head_dim must be even for rotate-half RoPE"
    d_ff = params["w1"].shape[1]

    # ---- host-side prep (once, outside the kernel) ----
    # Weights stored/streamed as bf16; every matmul accumulates in f32 on the MXU.
    wqkv = jnp.concatenate([params["wq"], params["wk"], params["wv"]],
                           axis=1).astype(jnp.bfloat16)                  # (D, 3D)
    wo = params["wo"].astype(jnp.bfloat16)                               # (D, D)
    w13 = jnp.concatenate([params["w1"], params["w3"]],
                          axis=1).astype(jnp.bfloat16)                   # (D, 2*d_ff)
    w2 = params["w2"].astype(jnp.bfloat16)                               # (d_ff, D)
    # Sign-folded sin table absorbs rotate_half's negation host-side.
    sign = jnp.concatenate([-jnp.ones((hd // 2,), jnp.float32),
                            jnp.ones((hd // 2,), jnp.float32)])
    sin_signed = (sin.astype(jnp.float32) * sign)
    cos_f = cos.astype(jnp.float32)

    # Fold B and S into one matmul row dimension; each grid step processes a row tile
    # holding `spb` whole sequences (target ~128 rows to fill the MXU).
    spb = max(1, min(B, max(1, 128 // S)))
    while B % spb:
        spb -= 1
    TM = spb * S
    grid = (B // spb,)
    x2d = x.reshape(B * S, D)

    def const(shape):
        return pl.BlockSpec(shape, lambda r: (0,) * len(shape))

    in_specs = [
        pl.BlockSpec((TM, D), lambda r: (r, 0)),   # x row tile
        const((S, hd)),                            # cos
        const((S, hd)),                            # sin (sign-folded)
        const((1, D)),                             # rmsnorm1 gamma
        const((1, D)),                             # rmsnorm2 gamma
        const((D, 3 * D)),                         # fused wqkv (bf16)
        const((D, D)),                             # wo (bf16)
        const((D, 2 * d_ff)),                      # fused w1|w3 (bf16)
        const((d_ff, D)),                          # w2 (bf16)
    ]

    # Advisory cost estimate (bf16 weights accounted for) so XLA schedules around the call.
    M = B * S
    flops = (2 * M * D * (3 * D + D + 2 * d_ff) + 2 * M * d_ff * D
             + 4 * B * num_heads * S * S * hd)
    transcendentals = B * num_heads * S * S + M * d_ff + 2 * M
    bytes_accessed = (4 * 2 * M * D                                        # x in/out (f32)
                      + 2 * (3 * D * D + D * D + 2 * D * d_ff + d_ff * D)  # bf16 weights
                      + 4 * (2 * S * hd + 2 * D))                          # tables, gammas

    kernel = functools.partial(llama2_block_kernel, num_heads=num_heads,
                               d_ff=d_ff, seq_len=S, seqs_per_block=spb)
    out2d = pl.pallas_call(
        kernel,
        out_shape=jax.ShapeDtypeStruct((B * S, D), x.dtype),
        grid_spec=pltpu.PrefetchScalarGridSpec(
            num_scalar_prefetch=0,
            grid=grid,
            in_specs=in_specs,
            out_specs=pl.BlockSpec((TM, D), lambda r: (r, 0)),
        ),
        compiler_params=pltpu.CompilerParams(
            dimension_semantics=("parallel",),
            vmem_limit_bytes=32 * 1024 * 1024,
        ),
        cost_estimate=pl.CostEstimate(
            flops=flops,
            transcendentals=transcendentals,
            bytes_accessed=bytes_accessed,
        ),
    )(x2d, cos_f, sin_signed, params["g1"], params["g2"], wqkv, wo, w13, w2)
    return out2d.reshape(B, S, D)


def reference_block(x, mask, cos, sin, params, *, num_heads):
    """Pure-JAX f32 reference (same math) for a correctness check."""
    B, S, D = x.shape
    hd = D // num_heads
    eps = 1e-6

    def rmsnorm(v, g):
        return v * jax.lax.rsqrt(jnp.mean(v * v, -1, keepdims=True) + eps) * g

    def rope(t):  # t: (B, H, S, hd)
        t1, t2 = t[..., : hd // 2], t[..., hd // 2:]
        rot = jnp.concatenate([-t2, t1], axis=-1)
        return t * cos + rot * sin

    residual = x
    xn = rmsnorm(x, params["g1"])
    q = (xn @ params["wq"]).reshape(B, S, num_heads, hd).transpose(0, 2, 1, 3)
    k = (xn @ params["wk"]).reshape(B, S, num_heads, hd).transpose(0, 2, 1, 3)
    v = (xn @ params["wv"]).reshape(B, S, num_heads, hd).transpose(0, 2, 1, 3)
    q, k = rope(q), rope(k)
    scores = jnp.einsum("bhqd,bhkd->bhqk", q, k) / jnp.sqrt(jnp.float32(hd)) + mask
    attn = jax.nn.softmax(scores, axis=-1)
    ctx = jnp.einsum("bhqk,bhkd->bhqd", attn, v).transpose(0, 2, 1, 3).reshape(B, S, D)
    x1 = ctx @ params["wo"] + residual
    xn2 = rmsnorm(x1, params["g2"])
    h1 = xn2 @ params["w1"]
    ffn = ((h1 * jax.nn.sigmoid(h1)) * (xn2 @ params["w3"])) @ params["w2"]
    return ffn + x1


if __name__ == "__main__":
    # Small shapes consistent with the module: d_model=128, heads=4, d_ff=256, seq=8, batch=2.
    B, S, D, H, D_FF = 2, 8, 128, 4, 256
    hd = D // H

    key = jax.random.PRNGKey(0)
    keys = jax.random.split(key, 10)
    scale = 0.02
    params = {
        "g1": jnp.ones((1, D), jnp.float32),
        "g2": jnp.ones((1, D), jnp.float32),
        "wq": scale * jax.random.normal(keys[0], (D, D), jnp.float32),
        "wk": scale * jax.random.normal(keys[1], (D, D), jnp.float32),
        "wv": scale * jax.random.normal(keys[2], (D, D), jnp.float32),
        "wo": scale * jax.random.normal(keys[3], (D, D), jnp.float32),
        "w1": scale * jax.random.normal(keys[4], (D, D_FF), jnp.float32),
        "w2": scale * jax.random.normal(keys[5], (D_FF, D), jnp.float32),
        "w3": scale * jax.random.normal(keys[6], (D, D_FF), jnp.float32),
    }

    x = jax.random.normal(keys[7], (B, S, D), jnp.float32)

    # Causal additive mask (0 where attended, -1e9 where masked), shape (S, S).
    causal = jnp.tril(jnp.ones((S, S), jnp.bool_))
    mask = jnp.where(causal, 0.0, -1e9).astype(jnp.float32)

    # RoPE tables for head_dim, context_length >= S.
    inv_freq = 1.0 / (10000.0 ** (jnp.arange(0, hd, 2, dtype=jnp.float32) / hd))
    t = jnp.arange(S, dtype=jnp.float32)
    freqs = jnp.einsum("s,d->sd", t, inv_freq)            # (S, hd/2)
    emb = jnp.concatenate([freqs, freqs], axis=-1)        # (S, hd)
    cos, sin = jnp.cos(emb), jnp.sin(emb)

    out = llama2_block(x, mask, cos, sin, params, num_heads=H)
    out = jax.block_until_ready(out)

    ref = reference_block(x, mask, cos, sin, params, num_heads=H)
    assert out.shape == (B, S, D)
    # Tolerance reflects bf16 matmul operands/weights (f32 accumulation) and the
    # approximate EUP reciprocal in the softmax, vs. an all-f32 reference.
    assert jnp.allclose(out, ref, rtol=5e-3, atol=5e-3), "mismatch vs reference"

    print("KERNEL_OK")
</pallas_src>

<mosaic_0001>
module attributes {stable_mosaic.version = 11 : i64} {
  func.func @llama2_block_kernel(%arg0: i32, %arg1: memref<16x128xf32, #tpu.memory_space<vmem>>, %arg2: memref<8x32xf32, #tpu.memory_space<vmem>>, %arg3: memref<8x32xf32, #tpu.memory_space<vmem>>, %arg4: memref<1x128xf32, #tpu.memory_space<vmem>>, %arg5: memref<1x128xf32, #tpu.memory_space<vmem>>, %arg6: memref<128x384xbf16, #tpu.memory_space<vmem>>, %arg7: memref<128x128xbf16, #tpu.memory_space<vmem>>, %arg8: memref<128x512xbf16, #tpu.memory_space<vmem>>, %arg9: memref<256x128xbf16, #tpu.memory_space<vmem>>, %arg10: memref<16x128xf32, #tpu.memory_space<vmem>>) attributes {dimension_semantics = [#tpu.dimension_semantics<parallel>], iteration_bounds = array<i64: 1>, scalar_prefetch = 0 : i64, scratch_operands = 0 : i64, tpu.core_type = #tpu.core_type<tc>, window_params = [{transform_indices = @transform_0, window_bounds = array<i64: 16, 128>}, {pipeline_mode = #tpu.pipeline_mode<synchronous>, transform_indices = @transform_1, window_bounds = array<i64: 8, 32>}, {pipeline_mode = #tpu.pipeline_mode<synchronous>, transform_indices = @transform_2, window_bounds = array<i64: 8, 32>}, {pipeline_mode = #tpu.pipeline_mode<synchronous>, transform_indices = @transform_3, window_bounds = array<i64: 1, 128>}, {pipeline_mode = #tpu.pipeline_mode<synchronous>, transform_indices = @transform_4, window_bounds = array<i64: 1, 128>}, {pipeline_mode = #tpu.pipeline_mode<synchronous>, transform_indices = @transform_5, window_bounds = array<i64: 128, 384>}, {pipeline_mode = #tpu.pipeline_mode<synchronous>, transform_indices = @transform_6, window_bounds = array<i64: 128, 128>}, {pipeline_mode = #tpu.pipeline_mode<synchronous>, transform_indices = @transform_7, window_bounds = array<i64: 128, 512>}, {pipeline_mode = #tpu.pipeline_mode<synchronous>, transform_indices = @transform_8, window_bounds = array<i64: 256, 128>}, {transform_indices = @transform_9, window_bounds = array<i64: 16, 128>}]} {
    %c0 = arith.constant 0 : index
    %c0_0 = arith.constant 0 : index
    %0 = vector.load %arg1[%c0, %c0_0] : memref<16x128xf32, #tpu.memory_space<vmem>>, vector<16x128xf32>
    %1 = arith.mulf %0, %0 : vector<16x128xf32>
    %cst = arith.constant dense<0.000000e+00> : vector<16xf32>
    %2 = vector.multi_reduction <add>, %1, %cst [1] : vector<16x128xf32> to vector<16xf32>
    %3 = vector.shape_cast %2 : vector<16xf32> to vector<16x1xf32>
    %cst_1 = arith.constant 1.280000e+02 : f32
    %4 = vector.broadcast %cst_1 : f32 to vector<16x1xf32>
    %5 = arith.divf %3, %4 : vector<16x1xf32>
    %cst_2 = arith.constant 9.99999997E-7 : f32
    %6 = vector.broadcast %cst_2 : f32 to vector<16x1xf32>
    %7 = arith.addf %5, %6 : vector<16x1xf32>
    %8 = math.rsqrt %7 : vector<16x1xf32>
    %9 = vector.broadcast %8 : vector<16x1xf32> to vector<16x128xf32>
    %10 = arith.mulf %0, %9 : vector<16x128xf32>
    %c0_3 = arith.constant 0 : index
    %c0_4 = arith.constant 0 : index
    %11 = vector.load %arg4[%c0_3, %c0_4] : memref<1x128xf32, #tpu.memory_space<vmem>>, vector<1x128xf32>
    %12 = vector.broadcast %11 : vector<1x128xf32> to vector<16x128xf32>
    %13 = arith.mulf %10, %12 : vector<16x128xf32>
    %14 = arith.truncf %13 : vector<16x128xf32> to vector<16x128xbf16>
    %c0_5 = arith.constant 0 : index
    %c0_6 = arith.constant 0 : index
    %15 = vector.load %arg6[%c0_5, %c0_6] : memref<128x384xbf16, #tpu.memory_space<vmem>>, vector<128x384xbf16>
    %cst_7 = arith.constant dense<0.000000e+00> : vector<16x384xf32>
    %16 = tpu.matmul %14, %15, %cst_7 {dimension_numbers = #tpu.dot_dimension_numbers<[1], [0], [0], [1], [0, 0, 1, 1], [], []>} : vector<16x128xbf16>, vector<128x384xbf16>, vector<16x384xf32> -> vector<16x384xf32>
    %17 = vector.extract_strided_slice %16 {offsets = [0, 0], sizes = [16, 32], strides = [1, 1]} : vector<16x384xf32> to vector<16x32xf32>
    %18 = vector.shape_cast %17 : vector<16x32xf32> to vector<2x8x32xf32>
    %19 = vector.extract_strided_slice %16 {offsets = [0, 32], sizes = [16, 32], strides = [1, 1]} : vector<16x384xf32> to vector<16x32xf32>
    %20 = vector.shape_cast %19 : vector<16x32xf32> to vector<2x8x32xf32>
    %21 = vector.extract_strided_slice %16 {offsets = [0, 64], sizes = [16, 32], strides = [1, 1]} : vector<16x384xf32> to vector<16x32xf32>
    %22 = vector.shape_cast %21 : vector<16x32xf32> to vector<2x8x32xf32>
    %23 = vector.extract_strided_slice %16 {offsets = [0, 96], sizes = [16, 32], strides = [1, 1]} : vector<16x384xf32> to vector<16x32xf32>
    %24 = vector.shape_cast %23 : vector<16x32xf32> to vector<2x8x32xf32>
    %25 = tpu.concatenate %18, %20, %22, %24 in 0 : vector<2x8x32xf32>, vector<2x8x32xf32>, vector<2x8x32xf32>, vector<2x8x32xf32> -> vector<8x8x32xf32>
    %26 = vector.extract_strided_slice %16 {offsets = [0, 128], sizes = [16, 32], strides = [1, 1]} : vector<16x384xf32> to vector<16x32xf32>
    %27 = vector.shape_cast %26 : vector<16x32xf32> to vector<2x8x32xf32>
    %28 = vector.extract_strided_slice %16 {offsets = [0, 160], sizes = [16, 32], strides = [1, 1]} : vector<16x384xf32> to vector<16x32xf32>
    %29 = vector.shape_cast %28 : vector<16x32xf32> to vector<2x8x32xf32>
    %30 = vector.extract_strided_slice %16 {offsets = [0, 192], sizes = [16, 32], strides = [1, 1]} : vector<16x384xf32> to vector<16x32xf32>
    %31 = vector.shape_cast %30 : vector<16x32xf32> to vector<2x8x32xf32>
    %32 = vector.extract_strided_slice %16 {offsets = [0, 224], sizes = [16, 32], strides = [1, 1]} : vector<16x384xf32> to vector<16x32xf32>
    %33 = vector.shape_cast %32 : vector<16x32xf32> to vector<2x8x32xf32>
    %34 = tpu.concatenate %27, %29, %31, %33 in 0 : vector<2x8x32xf32>, vector<2x8x32xf32>, vector<2x8x32xf32>, vector<2x8x32xf32> -> vector<8x8x32xf32>
    %35 = vector.extract_strided_slice %16 {offsets = [0, 256], sizes = [16, 32], strides = [1, 1]} : vector<16x384xf32> to vector<16x32xf32>
    %36 = vector.shape_cast %35 : vector<16x32xf32> to vector<2x8x32xf32>
    %37 = vector.extract_strided_slice %16 {offsets = [0, 288], sizes = [16, 32], strides = [1, 1]} : vector<16x384xf32> to vector<16x32xf32>
    %38 = vector.shape_cast %37 : vector<16x32xf32> to vector<2x8x32xf32>
    %39 = vector.extract_strided_slice %16 {offsets = [0, 320], sizes = [16, 32], strides = [1, 1]} : vector<16x384xf32> to vector<16x32xf32>
    %40 = vector.shape_cast %39 : vector<16x32xf32> to vector<2x8x32xf32>
    %41 = vector.extract_strided_slice %16 {offsets = [0, 352], sizes = [16, 32], strides = [1, 1]} : vector<16x384xf32> to vector<16x32xf32>
    %42 = vector.shape_cast %41 : vector<16x32xf32> to vector<2x8x32xf32>
    %43 = tpu.concatenate %36, %38, %40, %42 in 0 : vector<2x8x32xf32>, vector<2x8x32xf32>, vector<2x8x32xf32>, vector<2x8x32xf32> -> vector<8x8x32xf32>
    %c0_8 = arith.constant 0 : index
    %c0_9 = arith.constant 0 : index
    %44 = vector.load %arg2[%c0_8, %c0_9] : memref<8x32xf32, #tpu.memory_space<vmem>>, vector<8x32xf32>
    %c0_10 = arith.constant 0 : index
    %c0_11 = arith.constant 0 : index
    %45 = vector.load %arg3[%c0_10, %c0_11] : memref<8x32xf32, #tpu.memory_space<vmem>>, vector<8x32xf32>
    %cst_12 = arith.constant 3.200000e+01 : f32
    %46 = math.sqrt %cst_12 : f32
    %cst_13 = arith.constant 1.000000e+00 : f32
    %47 = arith.divf %cst_13, %46 : f32
    %48 = vector.extract_strided_slice %25 {offsets = [0, 0, 16], sizes = [8, 8, 16], strides = [1, 1, 1]} : vector<8x8x32xf32> to vector<8x8x16xf32>
    %49 = vector.extract_strided_slice %25 {offsets = [0, 0, 0], sizes = [8, 8, 16], strides = [1, 1, 1]} : vector<8x8x32xf32> to vector<8x8x16xf32>
    %50 = tpu.concatenate %48, %49 in 2 : vector<8x8x16xf32>, vector<8x8x16xf32> -> vector<8x8x32xf32>
    %51 = vector.shape_cast %44 : vector<8x32xf32> to vector<1x8x32xf32>
    %52 = vector.broadcast %51 : vector<1x8x32xf32> to vector<8x8x32xf32>
    %53 = arith.mulf %25, %52 : vector<8x8x32xf32>
    %54 = vector.shape_cast %45 : vector<8x32xf32> to vector<1x8x32xf32>
    %55 = vector.broadcast %54 : vector<1x8x32xf32> to vector<8x8x32xf32>
    %56 = arith.mulf %50, %55 : vector<8x8x32xf32>
    %57 = arith.addf %53, %56 : vector<8x8x32xf32>
    %58 = vector.broadcast %47 : f32 to vector<8x8x32xf32>
    %59 = arith.mulf %57, %58 : vector<8x8x32xf32>
    %60 = vector.extract_strided_slice %34 {offsets = [0, 0, 16], sizes = [8, 8, 16], strides = [1, 1, 1]} : vector<8x8x32xf32> to vector<8x8x16xf32>
    %61 = vector.extract_strided_slice %34 {offsets = [0, 0, 0], sizes = [8, 8, 16], strides = [1, 1, 1]} : vector<8x8x32xf32> to vector<8x8x16xf32>
    %62 = tpu.concatenate %60, %61 in 2 : vector<8x8x16xf32>, vector<8x8x16xf32> -> vector<8x8x32xf32>
    %63 = vector.shape_cast %44 : vector<8x32xf32> to vector<1x8x32xf32>
    %64 = vector.broadcast %63 : vector<1x8x32xf32> to vector<8x8x32xf32>
    %65 = arith.mulf %34, %64 : vector<8x8x32xf32>
    %66 = vector.shape_cast %45 : vector<8x32xf32> to vector<1x8x32xf32>
    %67 = vector.broadcast %66 : vector<1x8x32xf32> to vector<8x8x32xf32>
    %68 = arith.mulf %62, %67 : vector<8x8x32xf32>
    %69 = arith.addf %65, %68 : vector<8x8x32xf32>
    %70 = tpu.iota {dimensions = array<i32: 0>} : vector<8x8xi32>
    %71 = tpu.iota {dimensions = array<i32: 1>} : vector<8x8xi32>
    %72 = arith.cmpi sge, %70, %71 : vector<8x8xi32>
    %cst_14 = arith.constant 0.000000e+00 : f32
    %cst_15 = arith.constant -1.000000e+09 : f32
    %73 = vector.broadcast %cst_14 : f32 to vector<8x8xf32>
    %74 = vector.broadcast %cst_15 : f32 to vector<8x8xf32>
    %75 = arith.select %72, %73, %74 : vector<8x8xi1>, vector<8x8xf32>
    %76 = arith.truncf %59 : vector<8x8x32xf32> to vector<8x8x32xbf16>
    %77 = arith.truncf %69 : vector<8x8x32xf32> to vector<8x8x32xbf16>
    "tpu.trace_start"() <{level = 10 : i32, message = "bqd,bkd->bqk"}> : () -> ()
    %cst_16 = arith.constant dense<0.000000e+00> : vector<8x8x8xf32>
    %78 = tpu.matmul %76, %77, %cst_16 {dimension_numbers = #tpu.dot_dimension_numbers<[2], [2], [1], [1], [0, 0, 0, 1, 1, 1], [0], [0]>} : vector<8x8x32xbf16>, vector<8x8x32xbf16>, vector<8x8x8xf32> -> vector<8x8x8xf32>
    "tpu.trace_stop"() : () -> ()
    %79 = vector.shape_cast %75 : vector<8x8xf32> to vector<1x8x8xf32>
    %80 = vector.broadcast %79 : vector<1x8x8xf32> to vector<8x8x8xf32>
    %81 = arith.addf %78, %80 : vector<8x8x8xf32>
    %cst_17 = arith.constant dense<0xFF800000> : vector<8x8xf32>
    %82 = vector.multi_reduction <maximumf>, %81, %cst_17 [2] : vector<8x8x8xf32> to vector<8x8xf32>
    %83 = vector.shape_cast %82 : vector<8x8xf32> to vector<8x8x1xf32>
    %84 = vector.broadcast %83 : vector<8x8x1xf32> to vector<8x8x8xf32>
    %85 = arith.subf %81, %84 : vector<8x8x8xf32>
    %86 = math.exp %85 : vector<8x8x8xf32>
    %cst_18 = arith.constant dense<0.000000e+00> : vector<8x8xf32>
    %87 = vector.multi_reduction <add>, %86, %cst_18 [2] : vector<8x8x8xf32> to vector<8x8xf32>
    %88 = vector.shape_cast %87 : vector<8x8xf32> to vector<8x8x1xf32>
    %89 = tpu.reciprocal %88 {approx = true} : vector<8x8x1xf32> -> vector<8x8x1xf32>
    %90 = vector.broadcast %89 : vector<8x8x1xf32> to vector<8x8x8xf32>
    %91 = arith.mulf %86, %90 : vector<8x8x8xf32>
    %92 = arith.truncf %91 : vector<8x8x8xf32> to vector<8x8x8xbf16>
    %93 = arith.truncf %43 : vector<8x8x32xf32> to vector<8x8x32xbf16>
    "tpu.trace_start"() <{level = 10 : i32, message = "bqk,bkd->bqd"}> : () -> ()
    %cst_19 = arith.constant dense<0.000000e+00> : vector<8x8x32xf32>
    %94 = tpu.matmul %92, %93, %cst_19 {dimension_numbers = #tpu.dot_dimension_numbers<[2], [1], [1], [2], [0, 0, 0, 1, 1, 2], [0], [0]>} : vector<8x8x8xbf16>, vector<8x8x32xbf16>, vector<8x8x32xf32> -> vector<8x8x32xf32>
    "tpu.trace_stop"() : () -> ()
    %95 = vector.extract_strided_slice %94 {offsets = [0, 0, 0], sizes = [2, 8, 32], strides = [1, 1, 1]} : vector<8x8x32xf32> to vector<2x8x32xf32>
    %96 = vector.shape_cast %95 : vector<2x8x32xf32> to vector<16x32xf32>
    %97 = vector.extract_strided_slice %94 {offsets = [2, 0, 0], sizes = [2, 8, 32], strides = [1, 1, 1]} : vector<8x8x32xf32> to vector<2x8x32xf32>
    %98 = vector.shape_cast %97 : vector<2x8x32xf32> to vector<16x32xf32>
    %99 = vector.extract_strided_slice %94 {offsets = [4, 0, 0], sizes = [2, 8, 32], strides = [1, 1, 1]} : vector<8x8x32xf32> to vector<2x8x32xf32>
    %100 = vector.shape_cast %99 : vector<2x8x32xf32> to vector<16x32xf32>
    %101 = vector.extract_strided_slice %94 {offsets = [6, 0, 0], sizes = [2, 8, 32], strides = [1, 1, 1]} : vector<8x8x32xf32> to vector<2x8x32xf32>
    %102 = vector.shape_cast %101 : vector<2x8x32xf32> to vector<16x32xf32>
    %103 = tpu.concatenate %96, %98, %100, %102 in 1 : vector<16x32xf32>, vector<16x32xf32>, vector<16x32xf32>, vector<16x32xf32> -> vector<16x128xf32>
    %104 = arith.truncf %103 : vector<16x128xf32> to vector<16x128xbf16>
    %c0_20 = arith.constant 0 : index
    %c0_21 = arith.constant 0 : index
    %105 = vector.load %arg7[%c0_20, %c0_21] : memref<128x128xbf16, #tpu.memory_space<vmem>>, vector<128x128xbf16>
    %cst_22 = arith.constant dense<0.000000e+00> : vector<16x128xf32>
    %106 = tpu.matmul %104, %105, %cst_22 {dimension_numbers = #tpu.dot_dimension_numbers<[1], [0], [0], [1], [0, 0, 1, 1], [], []>} : vector<16x128xbf16>, vector<128x128xbf16>, vector<16x128xf32> -> vector<16x128xf32>
    %107 = arith.addf %0, %106 : vector<16x128xf32>
    %108 = arith.mulf %107, %107 : vector<16x128xf32>
    %cst_23 = arith.constant dense<0.000000e+00> : vector<16xf32>
    %109 = vector.multi_reduction <add>, %108, %cst_23 [1] : vector<16x128xf32> to vector<16xf32>
    %110 = vector.shape_cast %109 : vector<16xf32> to vector<16x1xf32>
    %cst_24 = arith.constant 1.280000e+02 : f32
    %111 = vector.broadcast %cst_24 : f32 to vector<16x1xf32>
    %112 = arith.divf %110, %111 : vector<16x1xf32>
    %cst_25 = arith.constant 9.99999997E-7 : f32
    %113 = vector.broadcast %cst_25 : f32 to vector<16x1xf32>
    %114 = arith.addf %112, %113 : vector<16x1xf32>
    %115 = math.rsqrt %114 : vector<16x1xf32>
    %116 = vector.broadcast %115 : vector<16x1xf32> to vector<16x128xf32>
    %117 = arith.mulf %107, %116 : vector<16x128xf32>
    %c0_26 = arith.constant 0 : index
    %c0_27 = arith.constant 0 : index
    %118 = vector.load %arg5[%c0_26, %c0_27] : memref<1x128xf32, #tpu.memory_space<vmem>>, vector<1x128xf32>
    %119 = vector.broadcast %118 : vector<1x128xf32> to vector<16x128xf32>
    %120 = arith.mulf %117, %119 : vector<16x128xf32>
    %121 = arith.truncf %120 : vector<16x128xf32> to vector<16x128xbf16>
    %c0_28 = arith.constant 0 : index
    %c0_29 = arith.constant 0 : index
    %122 = vector.load %arg8[%c0_28, %c0_29] : memref<128x512xbf16, #tpu.memory_space<vmem>>, vector<128x512xbf16>
    %cst_30 = arith.constant dense<0.000000e+00> : vector<16x512xf32>
    %123 = tpu.matmul %121, %122, %cst_30 {dimension_numbers = #tpu.dot_dimension_numbers<[1], [0], [0], [1], [0, 0, 1, 1], [], []>} : vector<16x128xbf16>, vector<128x512xbf16>, vector<16x512xf32> -> vector<16x512xf32>
    %124 = vector.extract_strided_slice %123 {offsets = [0, 0], sizes = [16, 256], strides = [1, 1]} : vector<16x512xf32> to vector<16x256xf32>
    %125 = vector.extract_strided_slice %123 {offsets = [0, 256], sizes = [16, 256], strides = [1, 1]} : vector<16x512xf32> to vector<16x256xf32>
    %cst_31 = arith.constant 5.000000e-01 : f32
    %126 = vector.broadcast %cst_31 : f32 to vector<16x256xf32>
    %127 = arith.mulf %126, %124 : vector<16x256xf32>
    %128 = math.tanh %127 : vector<16x256xf32>
    %cst_32 = arith.constant 1.000000e+00 : f32
    %129 = vector.broadcast %cst_32 : f32 to vector<16x256xf32>
    %130 = arith.addf %129, %128 : vector<16x256xf32>
    %cst_33 = arith.constant 5.000000e-01 : f32
    %131 = vector.broadcast %cst_33 : f32 to vector<16x256xf32>
    %132 = arith.mulf %131, %130 : vector<16x256xf32>
    %133 = arith.mulf %124, %132 : vector<16x256xf32>
    %134 = arith.mulf %133, %125 : vector<16x256xf32>
    %135 = arith.truncf %134 : vector<16x256xf32> to vector<16x256xbf16>
    %c0_34 = arith.constant 0 : index
    %c0_35 = arith.constant 0 : index
    %136 = vector.load %arg9[%c0_34, %c0_35] : memref<256x128xbf16, #tpu.memory_space<vmem>>, vector<256x128xbf16>
    %cst_36 = arith.constant dense<0.000000e+00> : vector<16x128xf32>
    %137 = tpu.matmul %135, %136, %cst_36 {dimension_numbers = #tpu.dot_dimension_numbers<[1], [0], [0], [1], [0, 0, 1, 1], [], []>} : vector<16x256xbf16>, vector<256x128xbf16>, vector<16x128xf32> -> vector<16x128xf32>
    %138 = arith.addf %137, %107 : vector<16x128xf32>
    %c0_37 = arith.constant 0 : index
    %c0_38 = arith.constant 0 : index
    %139 = vector.load %arg10[%c0_37, %c0_38] : memref<16x128xf32, #tpu.memory_space<vmem>>, vector<16x128xf32>
    tpu.vector_store %arg10[%c0_37, %c0_38], %138 {strides = array<i32>} : memref<16x128xf32, #tpu.memory_space<vmem>>, vector<16x128xf32>,
    return
  }
  func.func @transform_0(%arg0: i32) -> (i32, i32) {
    %c0_i32 = arith.constant 0 : i32
    %c0_i32_0 = arith.constant 0 : i32
    return %arg0, %c0_i32 : i32, i32
  }
  func.func @transform_1(%arg0: i32) -> (i32, i32) {
    %c0_i32 = arith.constant 0 : i32
    %c0_i32_0 = arith.constant 0 : i32
    %c0_i32_1 = arith.constant 0 : i32
    return %c0_i32, %c0_i32_0 : i32, i32
  }
  func.func @transform_2(%arg0: i32) -> (i32, i32) {
    %c0_i32 = arith.constant 0 : i32
    %c0_i32_0 = arith.constant 0 : i32
    %c0_i32_1 = arith.constant 0 : i32
    return %c0_i32, %c0_i32_0 : i32, i32
  }
  func.func @transform_3(%arg0: i32) -> (i32, i32) {
    %c0_i32 = arith.constant 0 : i32
    %c0_i32_0 = arith.constant 0 : i32
    %c0_i32_1 = arith.constant 0 : i32
    return %c0_i32, %c0_i32_0 : i32, i32
  }
  func.func @transform_4(%arg0: i32) -> (i32, i32) {
    %c0_i32 = arith.constant 0 : i32
    %c0_i32_0 = arith.constant 0 : i32
    %c0_i32_1 = arith.constant 0 : i32
    return %c0_i32, %c0_i32_0 : i32, i32
  }
  func.func @transform_5(%arg0: i32) -> (i32, i32) {
    %c0_i32 = arith.constant 0 : i32
    %c0_i32_0 = arith.constant 0 : i32
    %c0_i32_1 = arith.constant 0 : i32
    return %c0_i32, %c0_i32_0 : i32, i32
  }
  func.func @transform_6(%arg0: i32) -> (i32, i32) {
    %c0_i32 = arith.constant 0 : i32
    %c0_i32_0 = arith.constant 0 : i32
    %c0_i32_1 = arith.constant 0 : i32
    return %c0_i32, %c0_i32_0 : i32, i32
  }
  func.func @transform_7(%arg0: i32) -> (i32, i32) {
    %c0_i32 = arith.constant 0 : i32
    %c0_i32_0 = arith.constant 0 : i32
    %c0_i32_1 = arith.constant 0 : i32
    return %c0_i32, %c0_i32_0 : i32, i32
  }
  func.func @transform_8(%arg0: i32) -> (i32, i32) {
    %c0_i32 = arith.constant 0 : i32
    %c0_i32_0 = arith.constant 0 : i32
    %c0_i32_1 = arith.constant 0 : i32
    return %c0_i32, %c0_i32_0 : i32, i32
  }
  func.func @transform_9(%arg0: i32) -> (i32, i32) {
    %c0_i32 = arith.constant 0 : i32
    %c0_i32_0 = arith.constant 0 : i32
    return %arg0, %c0_i32 : i32, i32
  }
}

</mosaic_0001>

<llo_original>
// kernel: tpu_custom_call.1
$region0: #{tpu_custom_call.1}
  #allocation0 [shape = 'u32[]', space=smem, size = 0x4, offset = 0x4, fixed_abs, tag = 'smem constant byte address 0x4 - core index']
  #allocation1 [shape = 'u32[72,128]{1,0:T(1,128)}', space=vmem, size = 0x9000, scoped, tag = 'internal scratch']
  %s0 = inlined_call_operand.hbm [shape: f32[16,128], index: 0, kind: input, shape index: {}]
  %s1 = inlined_call_operand.hbm [shape: f32[8,32], index: 1, kind: input, shape index: {}]
  %s2 = inlined_call_operand.hbm [shape: f32[8,32], index: 2, kind: input, shape index: {}]
  %s3 = inlined_call_operand.vmem [shape: f32[1,128], index: 3, kind: input, shape index: {}]
  %s4 = inlined_call_operand.vmem [shape: f32[1,128], index: 4, kind: input, shape index: {}]
  %s5 = inlined_call_operand.hbm [shape: bf16[128,384], index: 5, kind: input, shape index: {}]
  %s6 = inlined_call_operand.hbm [shape: bf16[128,128], index: 6, kind: input, shape index: {}]
  %s7 = inlined_call_operand.hbm [shape: bf16[128,512], index: 7, kind: input, shape index: {}]
  %s8 = inlined_call_operand.hbm [shape: bf16[256,128], index: 8, kind: input, shape index: {}]
  %s9 = inlined_call_operand.hbm [shape: f32[16,128], index: 9, kind: output, shape index: {}]
  %s10 = sld [smem:[#allocation0]]
  $region74: #{tpu_custom_call.1} parent=0
    _
  %s12 = ssub.s32 1, %s10
  %s13 = scalar_select 0, %s12, %s10
  $region1: #{tpu_custom_call.1} parent=0
    #allocation2 [shape = 'u8[8192]{0}', space=vmem, size = 0x2000, scoped, tag = 'input window, operand 0, single buffered']
    #allocation3 [shape = 's32[1]{0}', space=sflag, size = 0x4, scoped, tag = 'scoped memory for tpu_custom_call.1']
    #allocation4 [shape = 's32[1]{0}', space=sflag, size = 0x4, scoped, tag = 'scoped memory for tpu_custom_call.1']
    #allocation5 [shape = 'u8[4096]{0}', space=vmem, size = 0x1000, scoped, tag = 'input window, operand 1, single buffered']
    #allocation6 [shape = 's32[1]{0}', space=sflag, size = 0x4, scoped, tag = 'scoped memory for tpu_custom_call.1']
    #allocation7 [shape = 'u8[4096]{0}', space=vmem, size = 0x1000, scoped, tag = 'input window, operand 2, single buffered']
    #allocation8 [shape = 'u8[98304]{0}', space=vmem, size = 0x18000, scoped, tag = 'input window, operand 5, single buffered']
    #allocation9 [shape = 's32[1]{0}', space=sflag, size = 0x4, scoped, tag = 'scoped memory for tpu_custom_call.1']
    #allocation10 [shape = 'u8[32768]{0}', space=vmem, size = 0x8000, scoped, tag = 'input window, operand 6, single buffered']
    #allocation11 [shape = 'u8[131072]{0}', space=vmem, size = 0x20000, scoped, tag = 'input window, operand 7, single buffered']
    #allocation12 [shape = 's32[1]{0}', space=sflag, size = 0x4, scoped, tag = 'scoped memory for tpu_custom_call.1']
    #allocation13 [shape = 'u8[65536]{0}', space=vmem, size = 0x10000, scoped, tag = 'input window, operand 8, single buffered']
    #allocation14 [shape = 'u8[8192]{0}', space=vmem, size = 0x2000, scoped, tag = 'output window, operand 0, single buffered']
    %14 = vsyncpa [#allocation3], 0
    %15 = vsyncpa [#allocation6], 0
    %16 = vsyncpa [#allocation9], 0
    %17 = vsyncpa [#allocation12], 0
    %18 = vsyncpa [#allocation4], 0
    // Predicated region
    $region2: #{tpu_custom_call.1} parent=1 // pred_check
      _
    $region3: #{tpu_custom_call.1} parent=1 // pred_check_branch
      %20 = sbr.rel (0) target = $region5
    $region4: #{tpu_custom_call.1} parent=1 // pred_region
      %22 = vsyncadd [#allocation3], 0
      %s23 = sshll.u32 %s0, 4
      %s24 = int_to_ptr.hbm [resolvable:$true] %s23
      %s25 = sshll.u32 [#allocation2], 4
      %s26 = int_to_ptr.vmem [resolvable:$true] %s25
      %31 = dma.hbm_to_vmem [thread:$0]  %s24, 256, %s26, [#allocation3], 128, 128, 8
    $region5: #{tpu_custom_call.1} parent=1 // pred_fallthru
      _
    // Predicated region
    $region6: #{tpu_custom_call.1} parent=1 // pred_check
      _
    $region7: #{tpu_custom_call.1} parent=1 // pred_check_branch
      %33 = sbr.rel (0) target = $region9
    $region8: #{tpu_custom_call.1} parent=1 // pred_region
      %35 = vsyncadd [#allocation6], 0
      %s37 = sshll.u32 %s1, 4
      %s38 = int_to_ptr.hbm [resolvable:$true] %s37
      %s39 = sshll.u32 [#allocation5], 4
      %s40 = int_to_ptr.vmem [resolvable:$true] %s39
      %42 = dma.hbm_to_vmem [thread:$0]  %s38, 128, %s40, [#allocation6]
    $region9: #{tpu_custom_call.1} parent=1 // pred_fallthru
      _
    // Predicated region
    $region10: #{tpu_custom_call.1} parent=1 // pred_check
      _
    $region11: #{tpu_custom_call.1} parent=1 // pred_check_branch
      %44 = sbr.rel (0) target = $region13
    $region12: #{tpu_custom_call.1} parent=1 // pred_region
      %46 = vsyncadd [#allocation6], 0
      %s48 = sshll.u32 %s2, 4
      %s49 = int_to_ptr.hbm [resolvable:$true] %s48
      %s50 = sshll.u32 [#allocation7], 4
      %s51 = int_to_ptr.vmem [resolvable:$true] %s50
      %53 = dma.hbm_to_vmem [thread:$0]  %s49, 128, %s51, [#allocation6]
    $region13: #{tpu_custom_call.1} parent=1 // pred_fallthru
      _
    // Predicated region
    $region14: #{tpu_custom_call.1} parent=1 // pred_check
      _
    $region15: #{tpu_custom_call.1} parent=1 // pred_check_branch
      %55 = sbr.rel (0) target = $region17
    $region16: #{tpu_custom_call.1} parent=1 // pred_region
      _
    $region17: #{tpu_custom_call.1} parent=1 // pred_fallthru
      _
    // Predicated region
    $region18: #{tpu_custom_call.1} parent=1 // pred_check
      _
    $region19: #{tpu_custom_call.1} parent=1 // pred_check_branch
      %57 = sbr.rel (0) target = $region21
    $region20: #{tpu_custom_call.1} parent=1 // pred_region
      _
    $region21: #{tpu_custom_call.1} parent=1 // pred_fallthru
      _
    // Predicated region
    $region22: #{tpu_custom_call.1} parent=1 // pred_check
      _
    $region23: #{tpu_custom_call.1} parent=1 // pred_check_branch
      %59 = sbr.rel (0) target = $region25
    $region24: #{tpu_custom_call.1} parent=1 // pred_region
      %61 = vsyncadd [#allocation9], 0
      %s62 = sshll.u32 %s5, 4
      %s63 = int_to_ptr.hbm [resolvable:$true] %s62
      %s64 = sshll.u32 [#allocation8], 4
      %s65 = int_to_ptr.vmem [resolvable:$true] %s64
      %70 = dma.hbm_to_vmem [thread:$0]  %s63, 3072, %s65, [#allocation9], 192, 192, 12
    $region25: #{tpu_custom_call.1} parent=1 // pred_fallthru
      _
    // Predicated region
    $region26: #{tpu_custom_call.1} parent=1 // pred_check
      _
    $region27: #{tpu_custom_call.1} parent=1 // pred_check_branch
      %72 = sbr.rel (0) target = $region29
    $region28: #{tpu_custom_call.1} parent=1 // pred_region
      %74 = vsyncadd [#allocation9], 0
      %s75 = sshll.u32 %s6, 4
      %s76 = int_to_ptr.hbm [resolvable:$true] %s75
      %s77 = sshll.u32 [#allocation10], 4
      %s78 = int_to_ptr.vmem [resolvable:$true] %s77
      %83 = dma.hbm_to_vmem [thread:$0]  %s76, 1024, %s78, [#allocation9], 64, 64, 4
    $region29: #{tpu_custom_call.1} parent=1 // pred_fallthru
      _
    // Predicated region
    $region30: #{tpu_custom_call.1} parent=1 // pred_check
      _
    $region31: #{tpu_custom_call.1} parent=1 // pred_check_branch
      %85 = sbr.rel (0) target = $region33
    $region32: #{tpu_custom_call.1} parent=1 // pred_region
      %87 = vsyncadd [#allocation12], 0
      %s88 = sshll.u32 %s7, 4
      %s89 = int_to_ptr.hbm [resolvable:$true] %s88
      %s90 = sshll.u32 [#allocation11], 4
      %s91 = int_to_ptr.vmem [resolvable:$true] %s90
      %96 = dma.hbm_to_vmem [thread:$0]  %s89, 4096, %s91, [#allocation12], 256, 256, 16
    $region33: #{tpu_custom_call.1} parent=1 // pred_fallthru
      _
    // Predicated region
    $region34: #{tpu_custom_call.1} parent=1 // pred_check
      _
    $region35: #{tpu_custom_call.1} parent=1 // pred_check_branch
      %98 = sbr.rel (0) target = $region37
    $region36: #{tpu_custom_call.1} parent=1 // pred_region
      %100 = vsyncadd [#allocation12], 0
      %s101 = sshll.u32 %s8, 4
      %s102 = int_to_ptr.hbm [resolvable:$true] %s101
      %s103 = sshll.u32 [#allocation13], 4
      %s104 = int_to_ptr.vmem [resolvable:$true] %s103
      %109 = dma.hbm_to_vmem [thread:$0]  %s102, 2048, %s104, [#allocation12], 64, 64, 4
    $region37: #{tpu_custom_call.1} parent=1 // pred_fallthru
      _
    // Predicated region
    $region38: #{tpu_custom_call.1} parent=1 // pred_check
      _
    $region39: #{tpu_custom_call.1} parent=1 // pred_check_branch
      %111 = sbr.rel (0) target = $region41
    $region40: #{tpu_custom_call.1} parent=1 // pred_region
      %113 = dma.done [#allocation3], 256
    $region41: #{tpu_custom_call.1} parent=1 // pred_fallthru
      _
    // Predicated region
    $region42: #{tpu_custom_call.1} parent=1 // pred_check
      _
    $region43: #{tpu_custom_call.1} parent=1 // pred_check_branch
      %115 = sbr.rel (0) target = $region45
    $region44: #{tpu_custom_call.1} parent=1 // pred_region
      %117 = dma.done [#allocation6], 128
    $region45: #{tpu_custom_call.1} parent=1 // pred_fallthru
      _
    // Predicated region
    $region46: #{tpu_custom_call.1} parent=1 // pred_check
      _
    $region47: #{tpu_custom_call.1} parent=1 // pred_check_branch
      %119 = sbr.rel (0) target = $region49
    $region48: #{tpu_custom_call.1} parent=1 // pred_region
      %121 = dma.done [#allocation6], 128
    $region49: #{tpu_custom_call.1} parent=1 // pred_fallthru
      _
    // Predicated region
    $region50: #{tpu_custom_call.1} parent=1 // pred_check
      _
    $region51: #{tpu_custom_call.1} parent=1 // pred_check_branch
      %123 = sbr.rel (0) target = $region53
    $region52: #{tpu_custom_call.1} parent=1 // pred_region
      %125 = dma.done [#allocation9], 3072
    $region53: #{tpu_custom_call.1} parent=1 // pred_fallthru
      _
    // Predicated region
    $region54: #{tpu_custom_call.1} parent=1 // pred_check
      _
    $region55: #{tpu_custom_call.1} parent=1 // pred_check_branch
      %127 = sbr.rel (0) target = $region57
    $region56: #{tpu_custom_call.1} parent=1 // pred_region
      %129 = dma.done [#allocation9], 1024
    $region57: #{tpu_custom_call.1} parent=1 // pred_fallthru
      _
    // Predicated region
    $region58: #{tpu_custom_call.1} parent=1 // pred_check
      _
    $region59: #{tpu_custom_call.1} parent=1 // pred_check_branch
      %131 = sbr.rel (0) target = $region61
    $region60: #{tpu_custom_call.1} parent=1 // pred_region
      %133 = dma.done [#allocation12], 4096
    $region61: #{tpu_custom_call.1} parent=1 // pred_fallthru
      _
    // Predicated region
    $region62: #{tpu_custom_call.1} parent=1 // pred_check
      _
    $region63: #{tpu_custom_call.1} parent=1 // pred_check_branch
      %135 = sbr.rel (0) target = $region65
    $region64: #{tpu_custom_call.1} parent=1 // pred_region
      %137 = dma.done [#allocation12], 2048
    $region65: #{tpu_custom_call.1} parent=1 // pred_fallthru
      _
    %v139 = vld [vmem:[#allocation2] sm:$0xff]
    %v140 = vld [vmem:[#allocation2 + $0x8] sm:$0xff]
    %v141 = vmul.f32 %v139, %v139
    %v142 = vmul.f32 %v140, %v140
    %143 = vadd.xlane.f32.xlu0 %v141
    %v144 = vpop.xlane.xlu0 %143
    %145 = vadd.xlane.f32.xlu0 %v142
    %v146 = vpop.xlane.xlu0 %145
    %v147 = vrcp.pop 128.0
    %v148 = vmul.f32 128.0, %v147
    %v149 = vsub.f32 1.0, %v148
    %v150 = vmul.f32 %v147, %v149
    %v151 = vadd.f32 %v147, %v150
    %vm152 = vweird.f32 %v147
    %v153 = vsel %vm152, %v147, %v151
    %v154 = vmul.f32 %v144, %v153
    %v155 = vmul.f32 %v146, %v153
    %v156 = vadd.f32 %v154, 1e-06
    %v157 = vadd.f32 %v155, 1e-06
    %v158 = vrsqrt.pop %v156
    %v159 = vmul.f32 %v158, %v156
    %v160 = vmul.f32 %v159, %v158
    %v161 = vmul.f32 0.5, %v160
    %v162 = vsub.f32 1.5, %v161
    %v163 = vmul.f32 %v158, %v162
    %vm164 = vweird.f32 %v156
    %vm165 = vweird.f32 %v158
    %vm166 = vmor %vm164, %vm165
    %v167 = vsel %vm166, %v158, %v163
    %v168 = vrsqrt.pop %v157
    %v169 = vmul.f32 %v168, %v157
    %v170 = vmul.f32 %v169, %v168
    %v171 = vmul.f32 0.5, %v170
    %v172 = vsub.f32 1.5, %v171
    %v173 = vmul.f32 %v168, %v172
    %vm174 = vweird.f32 %v157
    %vm175 = vweird.f32 %v168
    %vm176 = vmor %vm174, %vm175
    %v177 = vsel %vm176, %v168, %v173
    %v178 = vmul.f32 %v139, %v167
    %v179 = vmul.f32 %v140, %v177
    %v180 = vld [vmem:[%s3] sm:$0x1]
    %v182 = vperm.slane %v180, 0
    %v184 = vmul.f32 %v178, %v182
    %v185 = vmul.f32 %v179, %v182
    %v186 = vpack.c.bf16 %v185, %v184
    %v187 = vld [vmem:[#allocation8] sm:$0xff]
    %v188 = vld [vmem:[#allocation8 + $0x8] sm:$0xf]
    %v189 = vld [vmem:[#allocation8 + $0xc] sm:$0xff]
    %v190 = vld [vmem:[#allocation8 + $0x14] sm:$0xf]
    %v191 = vld [vmem:[#allocation8 + $0x18] sm:$0xff]
    %v192 = vld [vmem:[#allocation8 + $0x20] sm:$0xf]
    %v193 = vld [vmem:[#allocation8 + $0x24] sm:$0xff]
    %v194 = vld [vmem:[#allocation8 + $0x2c] sm:$0xf]
    %v195 = vld [vmem:[#allocation8 + $0x30] sm:$0xff]
    %v196 = vld [vmem:[#allocation8 + $0x38] sm:$0xf]
    %v197 = vld [vmem:[#allocation8 + $0x3c] sm:$0xff]
    %v198 = vld [vmem:[#allocation8 + $0x44] sm:$0xf]
    %v199 = vld [vmem:[#allocation8 + $0x48] sm:$0xff]
    %v200 = vld [vmem:[#allocation8 + $0x50] sm:$0xf]
    %v201 = vld [vmem:[#allocation8 + $0x54] sm:$0xff]
    %v202 = vld [vmem:[#allocation8 + $0x5c] sm:$0xf]
    %v203 = vld [vmem:[#allocation8 + $0x60] sm:$0xff]
    %v204 = vld [vmem:[#allocation8 + $0x68] sm:$0xf]
    %v205 = vld [vmem:[#allocation8 + $0x6c] sm:$0xff]
    %v206 = vld [vmem:[#allocation8 + $0x74] sm:$0xf]
    %v207 = vld [vmem:[#allocation8 + $0x78] sm:$0xff]
    %v208 = vld [vmem:[#allocation8 + $0x80] sm:$0xf]
    %v209 = vld [vmem:[#allocation8 + $0x84] sm:$0xff]
    %v210 = vld [vmem:[#allocation8 + $0x8c] sm:$0xf]
    %v211 = vld [vmem:[#allocation8 + $0x90] sm:$0xff]
    %v212 = vld [vmem:[#allocation8 + $0x98] sm:$0xf]
    %v213 = vld [vmem:[#allocation8 + $0x9c] sm:$0xff]
    %v214 = vld [vmem:[#allocation8 + $0xa4] sm:$0xf]
    %v215 = vld [vmem:[#allocation8 + $0xa8] sm:$0xff]
    %v216 = vld [vmem:[#allocation8 + $0xb0] sm:$0xf]
    %v217 = vld [vmem:[#allocation8 + $0xb4] sm:$0xff]
    %v218 = vld [vmem:[#allocation8 + $0xbc] sm:$0xf]
    %v251 = vunpack.c.l.b16 %v187
    %v252 = vunpack.c.h.b16 %v187
    %v253 = vunpack.c.l.b16 %v188
    %v254 = vunpack.c.l.b16 %v189
    %v255 = vunpack.c.h.b16 %v189
    %v256 = vunpack.c.l.b16 %v190
    %v257 = vunpack.c.l.b16 %v191
    %v258 = vunpack.c.h.b16 %v191
    %v259 = vunpack.c.l.b16 %v192
    %v260 = vunpack.c.l.b16 %v193
    %v261 = vunpack.c.h.b16 %v193
    %v262 = vunpack.c.l.b16 %v194
    %v263 = vunpack.c.l.b16 %v195
    %v264 = vunpack.c.h.b16 %v195
    %v265 = vunpack.c.l.b16 %v196
    %v266 = vunpack.c.l.b16 %v197
    %v267 = vunpack.c.h.b16 %v197
    %v268 = vunpack.c.l.b16 %v198
    %v269 = vunpack.c.l.b16 %v199
    %v270 = vunpack.c.h.b16 %v199
    %v271 = vunpack.c.l.b16 %v200
    %v272 = vunpack.c.l.b16 %v201
    %v273 = vunpack.c.h.b16 %v201
    %v274 = vunpack.c.l.b16 %v202
    %v275 = vunpack.c.l.b16 %v203
    %v276 = vunpack.c.h.b16 %v203
    %v277 = vunpack.c.l.b16 %v204
    %v278 = vunpack.c.l.b16 %v205
    %v279 = vunpack.c.h.b16 %v205
    %v280 = vunpack.c.l.b16 %v206
    %v281 = vunpack.c.l.b16 %v207
    %v282 = vunpack.c.h.b16 %v207
    %v283 = vunpack.c.l.b16 %v208
    %v284 = vunpack.c.l.b16 %v209
    %v285 = vunpack.c.h.b16 %v209
    %v286 = vunpack.c.l.b16 %v210
    %v287 = vunpack.c.l.b16 %v211
    %v288 = vunpack.c.h.b16 %v211
    %v289 = vunpack.c.l.b16 %v212
    %v290 = vunpack.c.l.b16 %v213
    %v291 = vunpack.c.h.b16 %v213
    %v292 = vunpack.c.l.b16 %v214
    %v293 = vunpack.c.l.b16 %v215
    %v294 = vunpack.c.h.b16 %v215
    %v295 = vunpack.c.l.b16 %v216
    %v296 = vunpack.c.l.b16 %v217
    %v297 = vunpack.c.h.b16 %v217
    %v298 = vunpack.c.l.b16 %v218
    %v299 = vpack.c.b16 %v254, %v251
    %v300 = vpack.c.b16 %v255, %v252
    %v301 = vpack.c.b16 %v256, %v253
    %v302 = vpack.c.b16 %v260, %v257
    %v303 = vpack.c.b16 %v261, %v258
    %v304 = vpack.c.b16 %v262, %v259
    %v305 = vpack.c.b16 %v266, %v263
    %v306 = vpack.c.b16 %v267, %v264
    %v307 = vpack.c.b16 %v268, %v265
    %v308 = vpack.c.b16 %v272, %v269
    %v309 = vpack.c.b16 %v273, %v270
    %v310 = vpack.c.b16 %v274, %v271
    %v311 = vpack.c.b16 %v278, %v275
    %v312 = vpack.c.b16 %v279, %v276
    %v313 = vpack.c.b16 %v280, %v277
    %v314 = vpack.c.b16 %v284, %v281
    %v315 = vpack.c.b16 %v285, %v282
    %v316 = vpack.c.b16 %v286, %v283
    %v317 = vpack.c.b16 %v290, %v287
    %v318 = vpack.c.b16 %v291, %v288
    %v319 = vpack.c.b16 %v292, %v289
    %v320 = vpack.c.b16 %v296, %v293
    %v321 = vpack.c.b16 %v297, %v294
    %v322 = vpack.c.b16 %v298, %v295
    %347 = vmatpush.bf16.msra.mxu0 %v320
    %348 = vmatpush.bf16.msra.mxu0 %v317
    %349 = vmatpush.bf16.msra.mxu0 %v314
    %350 = vmatpush.bf16.msra.mxu0 %v311
    %351 = vmatpush.bf16.msra.mxu0 %v308
    %352 = vmatpush.bf16.msra.mxu0 %v305
    %353 = vmatpush.bf16.msra.mxu0 %v302
    %354 = vmatpush.bf16.msra.mxu0 %v299
    %355 = vmatmul.bf16.gmra.mxu0 %v186
    %v356 = vpop.f32.mrf.mxu0
    %v357 = vadd.f32 0.0, %v356
    %v358 = vpop.f32.mrf.mxu0
    %v359 = vadd.f32 0.0, %v358
    %360 = vdwg.mxu0
    %361 = vmatpush.bf16.msra.mxu0 %v321
    %362 = vmatpush.bf16.msra.mxu0 %v318
    %363 = vmatpush.bf16.msra.mxu0 %v315
    %364 = vmatpush.bf16.msra.mxu0 %v312
    %365 = vmatpush.bf16.msra.mxu0 %v309
    %366 = vmatpush.bf16.msra.mxu0 %v306
    %367 = vmatpush.bf16.msra.mxu0 %v303
    %368 = vmatpush.bf16.msra.mxu0 %v300
    %369 = vmatmul.bf16.gmra.mxu0 %v186
    %v370 = vpop.f32.mrf.mxu0
    %v371 = vadd.f32 0.0, %v370
    %v372 = vpop.f32.mrf.mxu0
    %v373 = vadd.f32 0.0, %v372
    %374 = vdwg.mxu0
    %375 = vmatpush.bf16.msra.mxu0 %v322
    %376 = vmatpush.bf16.msra.mxu0 %v319
    %377 = vmatpush.bf16.msra.mxu0 %v316
    %378 = vmatpush.bf16.msra.mxu0 %v313
    %379 = vmatpush.bf16.msra.mxu0 %v310
    %380 = vmatpush.bf16.msra.mxu0 %v307
    %381 = vmatpush.bf16.msra.mxu0 %v304
    %382 = vmatpush.bf16.msra.mxu0 %v301
    %383 = vmatmul.bf16.gmra.mxu0 %v186
    %v384 = vpop.f32.mrf.mxu0
    %v385 = vadd.f32 0.0, %v384
    %v386 = vpop.f32.mrf.mxu0
    %v387 = vadd.f32 0.0, %v386
    %388 = vdwg.mxu0
    %391 = vrot.lane.b32.xlu0 %v357, 96
    %v392 = vpop.permute.xlu0 %391
    %393 = vrot.lane.b32.xlu0 %v359, 96
    %v394 = vpop.permute.xlu0 %393
    %397 = vrot.lane.b32.xlu0 %v357, 64
    %v398 = vpop.permute.xlu0 %397
    %399 = vrot.lane.b32.xlu0 %v359, 64
    %v400 = vpop.permute.xlu0 %399
    %403 = vrot.lane.b32.xlu0 %v357, 32
    %v404 = vpop.permute.xlu0 %403
    %405 = vrot.lane.b32.xlu0 %v359, 32
    %v406 = vpop.permute.xlu0 %405
    %411 = vrot.lane.b32.xlu0 %v371, 96
    %v412 = vpop.permute.xlu0 %411
    %413 = vrot.lane.b32.xlu0 %v373, 96
    %v414 = vpop.permute.xlu0 %413
    %417 = vrot.lane.b32.xlu0 %v371, 64
    %v418 = vpop.permute.xlu0 %417
    %419 = vrot.lane.b32.xlu0 %v373, 64
    %v420 = vpop.permute.xlu0 %419
    %423 = vrot.lane.b32.xlu0 %v371, 32
    %v424 = vpop.permute.xlu0 %423
    %425 = vrot.lane.b32.xlu0 %v373, 32
    %v426 = vpop.permute.xlu0 %425
    %431 = vrot.lane.b32.xlu0 %v385, 96
    %v432 = vpop.permute.xlu0 %431
    %433 = vrot.lane.b32.xlu0 %v387, 96
    %v434 = vpop.permute.xlu0 %433
    %437 = vrot.lane.b32.xlu0 %v385, 64
    %v438 = vpop.permute.xlu0 %437
    %439 = vrot.lane.b32.xlu0 %v387, 64
    %v440 = vpop.permute.xlu0 %439
    %443 = vrot.lane.b32.xlu0 %v385, 32
    %v444 = vpop.permute.xlu0 %443
    %445 = vrot.lane.b32.xlu0 %v387, 32
    %v446 = vpop.permute.xlu0 %445
    %v449 = vld [vmem:[#allocation5] sm:$0xff]
    %v450 = vld [vmem:[#allocation7] sm:$0xff]
    %451 = vrot.lane.b32.xlu0 %v357, 112
    %v452 = vpop.permute.xlu0 %451
    %453 = vrot.lane.b32.xlu0 %v359, 112
    %v454 = vpop.permute.xlu0 %453
    %455 = vrot.lane.b32.xlu0 %v392, 112
    %v456 = vpop.permute.xlu0 %455
    %457 = vrot.lane.b32.xlu0 %v394, 112
    %v458 = vpop.permute.xlu0 %457
    %459 = vrot.lane.b32.xlu0 %v398, 112
    %v460 = vpop.permute.xlu0 %459
    %461 = vrot.lane.b32.xlu0 %v400, 112
    %v462 = vpop.permute.xlu0 %461
    %463 = vrot.lane.b32.xlu0 %v404, 112
    %v464 = vpop.permute.xlu0 %463
    %465 = vrot.lane.b32.xlu0 %v406, 112
    %v466 = vpop.permute.xlu0 %465
    %475 = vrot.lane.b32.xlu0 %v357, 16
    %v476 = vpop.permute.xlu0 %475
    %477 = vrot.lane.b32.xlu0 %v359, 16
    %v478 = vpop.permute.xlu0 %477
    %479 = vrot.lane.b32.xlu0 %v392, 16
    %v480 = vpop.permute.xlu0 %479
    %481 = vrot.lane.b32.xlu0 %v394, 16
    %v482 = vpop.permute.xlu0 %481
    %483 = vrot.lane.b32.xlu0 %v398, 16
    %v484 = vpop.permute.xlu0 %483
    %485 = vrot.lane.b32.xlu0 %v400, 16
    %v486 = vpop.permute.xlu0 %485
    %487 = vrot.lane.b32.xlu0 %v404, 16
    %v488 = vpop.permute.xlu0 %487
    %489 = vrot.lane.b32.xlu0 %v406, 16
    %v490 = vpop.permute.xlu0 %489
    %vm499 = vcmask 130048
    %v500 = vsel %vm499, %v452, %v476
    %v501 = vsel %vm499, %v454, %v478
    %v502 = vsel %vm499, %v456, %v480
    %v503 = vsel %vm499, %v458, %v482
    %v504 = vsel %vm499, %v460, %v484
    %v505 = vsel %vm499, %v462, %v486
    %v506 = vsel %vm499, %v464, %v488
    %v507 = vsel %vm499, %v466, %v490
    %v508 = vmul.f32 %v357, %v449
    %v509 = vmul.f32 %v359, %v449
    %v510 = vmul.f32 %v392, %v449
    %v511 = vmul.f32 %v394, %v449
    %v512 = vmul.f32 %v398, %v449
    %v513 = vmul.f32 %v400, %v449
    %v514 = vmul.f32 %v404, %v449
    %v515 = vmul.f32 %v406, %v449
    %v516 = vmul.f32 %v500, %v450
    %v517 = vmul.f32 %v501, %v450
    %v518 = vmul.f32 %v502, %v450
    %v519 = vmul.f32 %v503, %v450
    %v520 = vmul.f32 %v504, %v450
    %v521 = vmul.f32 %v505, %v450
    %v522 = vmul.f32 %v506, %v450
    %v523 = vmul.f32 %v507, %v450
    %v524 = vadd.f32 %v508, %v516
    %v525 = vadd.f32 %v509, %v517
    %v526 = vadd.f32 %v510, %v518
    %v527 = vadd.f32 %v511, %v519
    %v528 = vadd.f32 %v512, %v520
    %v529 = vadd.f32 %v513, %v521
    %v530 = vadd.f32 %v514, %v522
    %v531 = vadd.f32 %v515, %v523
    %v532 = vmul.f32 %v524, 0.17677669
    %v533 = vmul.f32 %v525, 0.17677669
    %v534 = vmul.f32 %v526, 0.17677669
    %v535 = vmul.f32 %v527, 0.17677669
    %v536 = vmul.f32 %v528, 0.17677669
    %v537 = vmul.f32 %v529, 0.17677669
    %v538 = vmul.f32 %v530, 0.17677669
    %v539 = vmul.f32 %v531, 0.17677669
    %540 = vrot.lane.b32.xlu0 %v371, 112
    %v541 = vpop.permute.xlu0 %540
    %542 = vrot.lane.b32.xlu0 %v373, 112
    %v543 = vpop.permute.xlu0 %542
    %544 = vrot.lane.b32.xlu0 %v412, 112
    %v545 = vpop.permute.xlu0 %544
    %546 = vrot.lane.b32.xlu0 %v414, 112
    %v547 = vpop.permute.xlu0 %546
    %548 = vrot.lane.b32.xlu0 %v418, 112
    %v549 = vpop.permute.xlu0 %548
    %550 = vrot.lane.b32.xlu0 %v420, 112
    %v551 = vpop.permute.xlu0 %550
    %552 = vrot.lane.b32.xlu0 %v424, 112
    %v553 = vpop.permute.xlu0 %552
    %554 = vrot.lane.b32.xlu0 %v426, 112
    %v555 = vpop.permute.xlu0 %554
    %564 = vrot.lane.b32.xlu0 %v371, 16
    %v565 = vpop.permute.xlu0 %564
    %566 = vrot.lane.b32.xlu0 %v373, 16
    %v567 = vpop.permute.xlu0 %566
    %568 = vrot.lane.b32.xlu0 %v412, 16
    %v569 = vpop.permute.xlu0 %568
    %570 = vrot.lane.b32.xlu0 %v414, 16
    %v571 = vpop.permute.xlu0 %570
    %572 = vrot.lane.b32.xlu0 %v418, 16
    %v573 = vpop.permute.xlu0 %572
    %574 = vrot.lane.b32.xlu0 %v420, 16
    %v575 = vpop.permute.xlu0 %574
    %576 = vrot.lane.b32.xlu0 %v424, 16
    %v577 = vpop.permute.xlu0 %576
    %578 = vrot.lane.b32.xlu0 %v426, 16
    %v579 = vpop.permute.xlu0 %578
    %v588 = vsel %vm499, %v541, %v565
    %v589 = vsel %vm499, %v543, %v567
    %v590 = vsel %vm499, %v545, %v569
    %v591 = vsel %vm499, %v547, %v571
    %v592 = vsel %vm499, %v549, %v573
    %v593 = vsel %vm499, %v551, %v575
    %v594 = vsel %vm499, %v553, %v577
    %v595 = vsel %vm499, %v555, %v579
    %v596 = vmul.f32 %v371, %v449
    %v597 = vmul.f32 %v373, %v449
    %v598 = vmul.f32 %v412, %v449
    %v599 = vmul.f32 %v414, %v449
    %v600 = vmul.f32 %v418, %v449
    %v601 = vmul.f32 %v420, %v449
    %v602 = vmul.f32 %v424, %v449
    %v603 = vmul.f32 %v426, %v449
    %v604 = vmul.f32 %v588, %v450
    %v605 = vmul.f32 %v589, %v450
    %v606 = vmul.f32 %v590, %v450
    %v607 = vmul.f32 %v591, %v450
    %v608 = vmul.f32 %v592, %v450
    %v609 = vmul.f32 %v593, %v450
    %v610 = vmul.f32 %v594, %v450
    %v611 = vmul.f32 %v595, %v450
    %v612 = vadd.f32 %v596, %v604
    %v613 = vadd.f32 %v597, %v605
    %v614 = vadd.f32 %v598, %v606
    %v615 = vadd.f32 %v599, %v607
    %v616 = vadd.f32 %v600, %v608
    %v617 = vadd.f32 %v601, %v609
    %v618 = vadd.f32 %v602, %v610
    %v619 = vadd.f32 %v603, %v611
    %v620 = vlaneseq
    %v621 = vshrl.u32 %v620, 7
    %v622 = vlaneseq
    %v623 = vand.u32 %v622, 127
    %vm624 = vcmp.ge.s32.totalorder %v621, %v623
    %v625 = vsel %vm624, 0.0, -1e+09
    %v626 = vpack.c.bf16 %v532, %v532
    %v627 = vpack.c.bf16 %v533, %v533
    %v628 = vpack.c.bf16 %v534, %v534
    %v629 = vpack.c.bf16 %v535, %v535
    %v630 = vpack.c.bf16 %v536, %v536
    %v631 = vpack.c.bf16 %v537, %v537
    %v632 = vpack.c.bf16 %v538, %v538
    %v633 = vpack.c.bf16 %v539, %v539
    %v634 = vpack.c.bf16 %v612, %v612
    %v635 = vpack.c.bf16 %v613, %v613
    %v636 = vpack.c.bf16 %v614, %v614
    %v637 = vpack.c.bf16 %v615, %v615
    %v638 = vpack.c.bf16 %v616, %v616
    %v639 = vpack.c.bf16 %v617, %v617
    %v640 = vpack.c.bf16 %v618, %v618
    %v641 = vpack.c.bf16 %v619, %v619
    %vm642 = vcmask 261120
    %v644 = vsel %vm642, %v626, 0
    %v647 = vsel %vm642, %v634, 0
    %649 = vmatpush.bf16.xpose.msra.mxu0 0
    %650 = vmatpush.bf16.xpose.msra.mxu0 0
    %651 = vmatpush.bf16.xpose.msra.mxu0 0
    %652 = vmatpush.bf16.xpose.msra.mxu0 0
    %653 = vmatpush.bf16.xpose.msra.mxu0 0
    %654 = vmatpush.bf16.xpose.msra.mxu0 0
    %655 = vmatpush.bf16.xpose.msra.mxu0 0
    %656 = vmatpush.bf16.xpose.msra.mxu0 %v647
    %657 = vmatmul.bf16.gmra.mxu0 %v644
    %v658 = vpop.f32.mrf.mxu0
    %v659 = vadd.f32 %v625, %v658
    %v660 = vpop.f32.mrf.mxu0
    %661 = vdwg.mxu0
    %v663 = vsel %vm642, %v627, 0
    %v666 = vsel %vm642, %v635, 0
    %668 = vmatpush.bf16.xpose.msra.mxu0 0
    %669 = vmatpush.bf16.xpose.msra.mxu0 0
    %670 = vmatpush.bf16.xpose.msra.mxu0 0
    %671 = vmatpush.bf16.xpose.msra.mxu0 0
    %672 = vmatpush.bf16.xpose.msra.mxu0 0
    %673 = vmatpush.bf16.xpose.msra.mxu0 0
    %674 = vmatpush.bf16.xpose.msra.mxu0 0
    %675 = vmatpush.bf16.xpose.msra.mxu0 %v666
    %676 = vmatmul.bf16.gmra.mxu0 %v663
    %v677 = vpop.f32.mrf.mxu0
    %v678 = vadd.f32 %v625, %v677
    %v679 = vpop.f32.mrf.mxu0
    %680 = vdwg.mxu0
    %v682 = vsel %vm642, %v628, 0
    %v685 = vsel %vm642, %v636, 0
    %687 = vmatpush.bf16.xpose.msra.mxu0 0
    %688 = vmatpush.bf16.xpose.msra.mxu0 0
    %689 = vmatpush.bf16.xpose.msra.mxu0 0
    %690 = vmatpush.bf16.xpose.msra.mxu0 0
    %691 = vmatpush.bf16.xpose.msra.mxu0 0
    %692 = vmatpush.bf16.xpose.msra.mxu0 0
    %693 = vmatpush.bf16.xpose.msra.mxu0 0
    %694 = vmatpush.bf16.xpose.msra.mxu0 %v685
    %695 = vmatmul.bf16.gmra.mxu0 %v682
    %v696 = vpop.f32.mrf.mxu0
    %v697 = vadd.f32 %v625, %v696
    %v698 = vpop.f32.mrf.mxu0
    %699 = vdwg.mxu0
    %v701 = vsel %vm642, %v629, 0
    %v704 = vsel %vm642, %v637, 0
    %706 = vmatpush.bf16.xpose.msra.mxu0 0
    %707 = vmatpush.bf16.xpose.msra.mxu0 0
    %708 = vmatpush.bf16.xpose.msra.mxu0 0
    %709 = vmatpush.bf16.xpose.msra.mxu0 0
    %710 = vmatpush.bf16.xpose.msra.mxu0 0
    %711 = vmatpush.bf16.xpose.msra.mxu0 0
    %712 = vmatpush.bf16.xpose.msra.mxu0 0
    %713 = vmatpush.bf16.xpose.msra.mxu0 %v704
    %714 = vmatmul.bf16.gmra.mxu0 %v701
    %v715 = vpop.f32.mrf.mxu0
    %v716 = vadd.f32 %v625, %v715
    %v717 = vpop.f32.mrf.mxu0
    %718 = vdwg.mxu0
    %v720 = vsel %vm642, %v630, 0
    %v723 = vsel %vm642, %v638, 0
    %725 = vmatpush.bf16.xpose.msra.mxu0 0
    %726 = vmatpush.bf16.xpose.msra.mxu0 0
    %727 = vmatpush.bf16.xpose.msra.mxu0 0
    %728 = vmatpush.bf16.xpose.msra.mxu0 0
    %729 = vmatpush.bf16.xpose.msra.mxu0 0
    %730 = vmatpush.bf16.xpose.msra.mxu0 0
    %731 = vmatpush.bf16.xpose.msra.mxu0 0
    %732 = vmatpush.bf16.xpose.msra.mxu0 %v723
    %733 = vmatmul.bf16.gmra.mxu0 %v720
    %v734 = vpop.f32.mrf.mxu0
    %v735 = vadd.f32 %v625, %v734
    %v736 = vpop.f32.mrf.mxu0
    %737 = vdwg.mxu0
    %v739 = vsel %vm642, %v631, 0
    %v742 = vsel %vm642, %v639, 0
    %744 = vmatpush.bf16.xpose.msra.mxu0 0
    %745 = vmatpush.bf16.xpose.msra.mxu0 0
    %746 = vmatpush.bf16.xpose.msra.mxu0 0
    %747 = vmatpush.bf16.xpose.msra.mxu0 0
    %748 = vmatpush.bf16.xpose.msra.mxu0 0
    %749 = vmatpush.bf16.xpose.msra.mxu0 0
    %750 = vmatpush.bf16.xpose.msra.mxu0 0
    %751 = vmatpush.bf16.xpose.msra.mxu0 %v742
    %752 = vmatmul.bf16.gmra.mxu0 %v739
    %v753 = vpop.f32.mrf.mxu0
    %v754 = vadd.f32 %v625, %v753
    %v755 = vpop.f32.mrf.mxu0
    %756 = vdwg.mxu0
    %v758 = vsel %vm642, %v632, 0
    %v761 = vsel %vm642, %v640, 0
    %763 = vmatpush.bf16.xpose.msra.mxu0 0
    %764 = vmatpush.bf16.xpose.msra.mxu0 0
    %765 = vmatpush.bf16.xpose.msra.mxu0 0
    %766 = vmatpush.bf16.xpose.msra.mxu0 0
    %767 = vmatpush.bf16.xpose.msra.mxu0 0
    %768 = vmatpush.bf16.xpose.msra.mxu0 0
    %769 = vmatpush.bf16.xpose.msra.mxu0 0
    %770 = vmatpush.bf16.xpose.msra.mxu0 %v761
    %771 = vmatmul.bf16.gmra.mxu0 %v758
    %v772 = vpop.f32.mrf.mxu0
    %v773 = vadd.f32 %v625, %v772
    %v774 = vpop.f32.mrf.mxu0
    %775 = vdwg.mxu0
    %v777 = vsel %vm642, %v633, 0
    %v780 = vsel %vm642, %v641, 0
    %782 = vmatpush.bf16.xpose.msra.mxu0 0
    %783 = vmatpush.bf16.xpose.msra.mxu0 0
    %784 = vmatpush.bf16.xpose.msra.mxu0 0
    %785 = vmatpush.bf16.xpose.msra.mxu0 0
    %786 = vmatpush.bf16.xpose.msra.mxu0 0
    %787 = vmatpush.bf16.xpose.msra.mxu0 0
    %788 = vmatpush.bf16.xpose.msra.mxu0 0
    %789 = vmatpush.bf16.xpose.msra.mxu0 %v780
    %790 = vmatmul.bf16.gmra.mxu0 %v777
    %v791 = vpop.f32.mrf.mxu0
    %v792 = vadd.f32 %v625, %v791
    %v793 = vpop.f32.mrf.mxu0
    %794 = vdwg.mxu0
    %vm795 = vcmask 64512
    %v796 = vsel %vm795, %v659, -inf
    %797 = vmax.xlane.f32.xlu0 %v796
    %v798 = vpop.xlane.xlu0 %797
    %v799 = vsel %vm795, %v678, -inf
    %800 = vmax.xlane.f32.xlu0 %v799
    %v801 = vpop.xlane.xlu0 %800
    %v802 = vsel %vm795, %v697, -inf
    %803 = vmax.xlane.f32.xlu0 %v802
    %v804 = vpop.xlane.xlu0 %803
    %v805 = vsel %vm795, %v716, -inf
    %806 = vmax.xlane.f32.xlu0 %v805
    %v807 = vpop.xlane.xlu0 %806
    %v808 = vsel %vm795, %v735, -inf
    %809 = vmax.xlane.f32.xlu0 %v808
    %v810 = vpop.xlane.xlu0 %809
    %v811 = vsel %vm795, %v754, -inf
    %812 = vmax.xlane.f32.xlu0 %v811
    %v813 = vpop.xlane.xlu0 %812
    %v814 = vsel %vm795, %v773, -inf
    %815 = vmax.xlane.f32.xlu0 %v814
    %v816 = vpop.xlane.xlu0 %815
    %v817 = vsel %vm795, %v792, -inf
    %818 = vmax.xlane.f32.xlu0 %v817
    %v819 = vpop.xlane.xlu0 %818
    %v820 = vsub.f32 %v659, %v798
    %v821 = vsub.f32 %v678, %v801
    %v822 = vsub.f32 %v697, %v804
    %v823 = vsub.f32 %v716, %v807
    %v824 = vsub.f32 %v735, %v810
    %v825 = vsub.f32 %v754, %v813
    %v826 = vsub.f32 %v773, %v816
    %v827 = vsub.f32 %v792, %v819
    %v828 = vmul.f32 %v820, 1.442695
    %v829 = vpow.pop %v828
    %v830 = vmul.f32 %v821, 1.442695
    %v831 = vpow.pop %v830
    %v832 = vmul.f32 %v822, 1.442695
    %v833 = vpow.pop %v832
    %v834 = vmul.f32 %v823, 1.442695
    %v835 = vpow.pop %v834
    %v836 = vmul.f32 %v824, 1.442695
    %v837 = vpow.pop %v836
    %v838 = vmul.f32 %v825, 1.442695
    %v839 = vpow.pop %v838
    %v840 = vmul.f32 %v826, 1.442695
    %v841 = vpow.pop %v840
    %v842 = vmul.f32 %v827, 1.442695
    %v843 = vpow.pop %v842
    %v844 = vsel %vm795, %v829, 0.0
    %845 = vadd.xlane.f32.xlu0 %v844
    %v846 = vpop.xlane.xlu0 %845
    %v847 = vsel %vm795, %v831, 0.0
    %848 = vadd.xlane.f32.xlu0 %v847
    %v849 = vpop.xlane.xlu0 %848
    %v850 = vsel %vm795, %v833, 0.0
    %851 = vadd.xlane.f32.xlu0 %v850
    %v852 = vpop.xlane.xlu0 %851
    %v853 = vsel %vm795, %v835, 0.0
    %854 = vadd.xlane.f32.xlu0 %v853
    %v855 = vpop.xlane.xlu0 %854
    %v856 = vsel %vm795, %v837, 0.0
    %857 = vadd.xlane.f32.xlu0 %v856
    %v858 = vpop.xlane.xlu0 %857
    %v859 = vsel %vm795, %v839, 0.0
    %860 = vadd.xlane.f32.xlu0 %v859
    %v861 = vpop.xlane.xlu0 %860
    %v862 = vsel %vm795, %v841, 0.0
    %863 = vadd.xlane.f32.xlu0 %v862
    %v864 = vpop.xlane.xlu0 %863
    %v865 = vsel %vm795, %v843, 0.0
    %866 = vadd.xlane.f32.xlu0 %v865
    %v867 = vpop.xlane.xlu0 %866
    %v868 = vrcp.pop %v846
    %v869 = vrcp.pop %v849
    %v870 = vrcp.pop %v852
    %v871 = vrcp.pop %v855
    %v872 = vrcp.pop %v858
    %v873 = vrcp.pop %v861
    %v874 = vrcp.pop %v864
    %v875 = vrcp.pop %v867
    %v876 = vmul.f32 %v829, %v868
    %v877 = vmul.f32 %v831, %v869
    %v878 = vmul.f32 %v833, %v870
    %v879 = vmul.f32 %v835, %v871
    %v880 = vmul.f32 %v837, %v872
    %v881 = vmul.f32 %v839, %v873
    %v882 = vmul.f32 %v841, %v874
    %v883 = vmul.f32 %v843, %v875
    %v884 = vpack.c.bf16 %v876, %v876
    %v885 = vpack.c.bf16 %v877, %v877
    %v886 = vpack.c.bf16 %v878, %v878
    %v887 = vpack.c.bf16 %v879, %v879
    %v888 = vpack.c.bf16 %v880, %v880
    %v889 = vpack.c.bf16 %v881, %v881
    %v890 = vpack.c.bf16 %v882, %v882
    %v891 = vpack.c.bf16 %v883, %v883
    %v892 = vpack.c.bf16 %v385, %v385
    %v893 = vpack.c.bf16 %v387, %v387
    %v894 = vpack.c.bf16 %v432, %v432
    %v895 = vpack.c.bf16 %v434, %v434
    %v896 = vpack.c.bf16 %v438, %v438
    %v897 = vpack.c.bf16 %v440, %v440
    %v898 = vpack.c.bf16 %v444, %v444
    %v899 = vpack.c.bf16 %v446, %v446
    %v901 = vsel %vm795, %v884, 0
    %vm903 = vcmask 1043456
    %v905 = vsel %vm903, %v892, 0
    %907 = vmatpush.bf16.msra.mxu0 0
    %908 = vmatpush.bf16.msra.mxu0 0
    %909 = vmatpush.bf16.msra.mxu0 0
    %910 = vmatpush.bf16.msra.mxu0 0
    %911 = vmatpush.bf16.msra.mxu0 0
    %912 = vmatpush.bf16.msra.mxu0 0
    %913 = vmatpush.bf16.msra.mxu0 0
    %914 = vmatpush.bf16.msra.mxu0 %v905
    %915 = vmatmul.bf16.gmra.mxu0 %v901
    %v916 = vpop.f32.mrf.mxu0
    %v917 = vadd.f32 0.0, %v916
    %v918 = vpop.f32.mrf.mxu0
    %919 = vdwg.mxu0
    %v921 = vsel %vm795, %v885, 0
    %v924 = vsel %vm903, %v893, 0
    %926 = vmatpush.bf16.msra.mxu0 0
    %927 = vmatpush.bf16.msra.mxu0 0
    %928 = vmatpush.bf16.msra.mxu0 0
    %929 = vmatpush.bf16.msra.mxu0 0
    %930 = vmatpush.bf16.msra.mxu0 0
    %931 = vmatpush.bf16.msra.mxu0 0
    %932 = vmatpush.bf16.msra.mxu0 0
    %933 = vmatpush.bf16.msra.mxu0 %v924
    %934 = vmatmul.bf16.gmra.mxu0 %v921
    %v935 = vpop.f32.mrf.mxu0
    %v936 = vadd.f32 0.0, %v935
    %v937 = vpop.f32.mrf.mxu0
    %938 = vdwg.mxu0
    %v940 = vsel %vm795, %v886, 0
    %v943 = vsel %vm903, %v894, 0
    %945 = vmatpush.bf16.msra.mxu0 0
    %946 = vmatpush.bf16.msra.mxu0 0
    %947 = vmatpush.bf16.msra.mxu0 0
    %948 = vmatpush.bf16.msra.mxu0 0
    %949 = vmatpush.bf16.msra.mxu0 0
    %950 = vmatpush.bf16.msra.mxu0 0
    %951 = vmatpush.bf16.msra.mxu0 0
    %952 = vmatpush.bf16.msra.mxu0 %v943
    %953 = vmatmul.bf16.gmra.mxu0 %v940
    %v954 = vpop.f32.mrf.mxu0
    %v955 = vadd.f32 0.0, %v954
    %v956 = vpop.f32.mrf.mxu0
    %957 = vdwg.mxu0
    %v959 = vsel %vm795, %v887, 0
    %v962 = vsel %vm903, %v895, 0
    %964 = vmatpush.bf16.msra.mxu0 0
    %965 = vmatpush.bf16.msra.mxu0 0
    %966 = vmatpush.bf16.msra.mxu0 0
    %967 = vmatpush.bf16.msra.mxu0 0
    %968 = vmatpush.bf16.msra.mxu0 0
    %969 = vmatpush.bf16.msra.mxu0 0
    %970 = vmatpush.bf16.msra.mxu0 0
    %971 = vmatpush.bf16.msra.mxu0 %v962
    %972 = vmatmul.bf16.gmra.mxu0 %v959
    %v973 = vpop.f32.mrf.mxu0
    %v974 = vadd.f32 0.0, %v973
    %v975 = vpop.f32.mrf.mxu0
    %976 = vdwg.mxu0
    %v978 = vsel %vm795, %v888, 0
    %v981 = vsel %vm903, %v896, 0
    %983 = vmatpush.bf16.msra.mxu0 0
    %984 = vmatpush.bf16.msra.mxu0 0
    %985 = vmatpush.bf16.msra.mxu0 0
    %986 = vmatpush.bf16.msra.mxu0 0
    %987 = vmatpush.bf16.msra.mxu0 0
    %988 = vmatpush.bf16.msra.mxu0 0
    %989 = vmatpush.bf16.msra.mxu0 0
    %990 = vmatpush.bf16.msra.mxu0 %v981
    %991 = vmatmul.bf16.gmra.mxu0 %v978
    %v992 = vpop.f32.mrf.mxu0
    %v993 = vadd.f32 0.0, %v992
    %v994 = vpop.f32.mrf.mxu0
    %995 = vdwg.mxu0
    %v997 = vsel %vm795, %v889, 0
    %v1000 = vsel %vm903, %v897, 0
    %1002 = vmatpush.bf16.msra.mxu0 0
    %1003 = vmatpush.bf16.msra.mxu0 0
    %1004 = vmatpush.bf16.msra.mxu0 0
    %1005 = vmatpush.bf16.msra.mxu0 0
    %1006 = vmatpush.bf16.msra.mxu0 0
    %1007 = vmatpush.bf16.msra.mxu0 0
    %1008 = vmatpush.bf16.msra.mxu0 0
    %1009 = vmatpush.bf16.msra.mxu0 %v1000
    %1010 = vmatmul.bf16.gmra.mxu0 %v997
    %v1011 = vpop.f32.mrf.mxu0
    %v1012 = vadd.f32 0.0, %v1011
    %v1013 = vpop.f32.mrf.mxu0
    %1014 = vdwg.mxu0
    %v1016 = vsel %vm795, %v890, 0
    %v1019 = vsel %vm903, %v898, 0
    %1021 = vmatpush.bf16.msra.mxu0 0
    %1022 = vmatpush.bf16.msra.mxu0 0
    %1023 = vmatpush.bf16.msra.mxu0 0
    %1024 = vmatpush.bf16.msra.mxu0 0
    %1025 = vmatpush.bf16.msra.mxu0 0
    %1026 = vmatpush.bf16.msra.mxu0 0
    %1027 = vmatpush.bf16.msra.mxu0 0
    %1028 = vmatpush.bf16.msra.mxu0 %v1019
    %1029 = vmatmul.bf16.gmra.mxu0 %v1016
    %v1030 = vpop.f32.mrf.mxu0
    %v1031 = vadd.f32 0.0, %v1030
    %v1032 = vpop.f32.mrf.mxu0
    %1033 = vdwg.mxu0
    %v1035 = vsel %vm795, %v891, 0
    %v1038 = vsel %vm903, %v899, 0
    %1040 = vmatpush.bf16.msra.mxu0 0
    %1041 = vmatpush.bf16.msra.mxu0 0
    %1042 = vmatpush.bf16.msra.mxu0 0
    %1043 = vmatpush.bf16.msra.mxu0 0
    %1044 = vmatpush.bf16.msra.mxu0 0
    %1045 = vmatpush.bf16.msra.mxu0 0
    %1046 = vmatpush.bf16.msra.mxu0 0
    %1047 = vmatpush.bf16.msra.mxu0 %v1038
    %1048 = vmatmul.bf16.gmra.mxu0 %v1035
    %v1049 = vpop.f32.mrf.mxu0
    %v1050 = vadd.f32 0.0, %v1049
    %v1051 = vpop.f32.mrf.mxu0
    %1052 = vdwg.mxu0
    %1055 = vrot.lane.b32.xlu0 %v955, 32
    %v1056 = vpop.permute.xlu0 %1055
    %1057 = vrot.lane.b32.xlu0 %v974, 32
    %v1058 = vpop.permute.xlu0 %1057
    %1063 = vrot.lane.b32.xlu0 %v993, 64
    %v1064 = vpop.permute.xlu0 %1063
    %1065 = vrot.lane.b32.xlu0 %v1012, 64
    %v1066 = vpop.permute.xlu0 %1065
    %1071 = vrot.lane.b32.xlu0 %v1031, 96
    %v1072 = vpop.permute.xlu0 %1071
    %1073 = vrot.lane.b32.xlu0 %v1050, 96
    %v1074 = vpop.permute.xlu0 %1073
    %v1077 = vsel %vm642, %v917, %v1056
    %v1078 = vsel %vm642, %v936, %v1058
    %vm1079 = vcmask 523264
    %v1080 = vsel %vm1079, %v1077, %v1064
    %v1081 = vsel %vm1079, %v1078, %v1066
    %vm1082 = vcmask 785408
    %v1083 = vsel %vm1082, %v1080, %v1072
    %v1084 = vsel %vm1082, %v1081, %v1074
    %v1085 = vpack.c.bf16 %v1084, %v1083
    %v1086 = vld [vmem:[#allocation10] sm:$0xf]
    %v1087 = vld [vmem:[#allocation10 + $0x4] sm:$0xf]
    %v1088 = vld [vmem:[#allocation10 + $0x8] sm:$0xf]
    %v1089 = vld [vmem:[#allocation10 + $0xc] sm:$0xf]
    %v1090 = vld [vmem:[#allocation10 + $0x10] sm:$0xf]
    %v1091 = vld [vmem:[#allocation10 + $0x14] sm:$0xf]
    %v1092 = vld [vmem:[#allocation10 + $0x18] sm:$0xf]
    %v1093 = vld [vmem:[#allocation10 + $0x1c] sm:$0xf]
    %v1094 = vld [vmem:[#allocation10 + $0x20] sm:$0xf]
    %v1095 = vld [vmem:[#allocation10 + $0x24] sm:$0xf]
    %v1096 = vld [vmem:[#allocation10 + $0x28] sm:$0xf]
    %v1097 = vld [vmem:[#allocation10 + $0x2c] sm:$0xf]
    %v1098 = vld [vmem:[#allocation10 + $0x30] sm:$0xf]
    %v1099 = vld [vmem:[#allocation10 + $0x34] sm:$0xf]
    %v1100 = vld [vmem:[#allocation10 + $0x38] sm:$0xf]
    %v1101 = vld [vmem:[#allocation10 + $0x3c] sm:$0xf]
    %v1118 = vunpack.c.l.b16 %v1086
    %v1119 = vunpack.c.l.b16 %v1087
    %v1120 = vunpack.c.l.b16 %v1088
    %v1121 = vunpack.c.l.b16 %v1089
    %v1122 = vunpack.c.l.b16 %v1090
    %v1123 = vunpack.c.l.b16 %v1091
    %v1124 = vunpack.c.l.b16 %v1092
    %v1125 = vunpack.c.l.b16 %v1093
    %v1126 = vunpack.c.l.b16 %v1094
    %v1127 = vunpack.c.l.b16 %v1095
    %v1128 = vunpack.c.l.b16 %v1096
    %v1129 = vunpack.c.l.b16 %v1097
    %v1130 = vunpack.c.l.b16 %v1098
    %v1131 = vunpack.c.l.b16 %v1099
    %v1132 = vunpack.c.l.b16 %v1100
    %v1133 = vunpack.c.l.b16 %v1101
    %v1134 = vpack.c.b16 %v1119, %v1118
    %v1135 = vpack.c.b16 %v1121, %v1120
    %v1136 = vpack.c.b16 %v1123, %v1122
    %v1137 = vpack.c.b16 %v1125, %v1124
    %v1138 = vpack.c.b16 %v1127, %v1126
    %v1139 = vpack.c.b16 %v1129, %v1128
    %v1140 = vpack.c.b16 %v1131, %v1130
    %v1141 = vpack.c.b16 %v1133, %v1132
    %1150 = vmatpush.bf16.msra.mxu0 %v1141
    %1151 = vmatpush.bf16.msra.mxu0 %v1140
    %1152 = vmatpush.bf16.msra.mxu0 %v1139
    %1153 = vmatpush.bf16.msra.mxu0 %v1138
    %1154 = vmatpush.bf16.msra.mxu0 %v1137
    %1155 = vmatpush.bf16.msra.mxu0 %v1136
    %1156 = vmatpush.bf16.msra.mxu0 %v1135
    %1157 = vmatpush.bf16.msra.mxu0 %v1134
    %1158 = vmatmul.bf16.gmra.mxu0 %v1085
    %v1159 = vpop.f32.mrf.mxu0
    %v1160 = vadd.f32 0.0, %v1159
    %v1161 = vpop.f32.mrf.mxu0
    %v1162 = vadd.f32 0.0, %v1161
    %1163 = vdwg.mxu0
    %v1164 = vadd.f32 %v139, %v1160
    %v1165 = vadd.f32 %v140, %v1162
    %v1166 = vmul.f32 %v1164, %v1164
    %v1167 = vmul.f32 %v1165, %v1165
    %1168 = vadd.xlane.f32.xlu0 %v1166
    %v1169 = vpop.xlane.xlu0 %1168
    %1170 = vadd.xlane.f32.xlu0 %v1167
    %v1171 = vpop.xlane.xlu0 %1170
    %v1172 = vmul.f32 %v1169, %v153
    %v1173 = vmul.f32 %v1171, %v153
    %v1174 = vadd.f32 %v1172, 1e-06
    %v1175 = vadd.f32 %v1173, 1e-06
    %v1176 = vrsqrt.pop %v1174
    %v1177 = vmul.f32 %v1176, %v1174
    %v1178 = vmul.f32 %v1177, %v1176
    %v1179 = vmul.f32 0.5, %v1178
    %v1180 = vsub.f32 1.5, %v1179
    %v1181 = vmul.f32 %v1176, %v1180
    %vm1182 = vweird.f32 %v1174
    %vm1183 = vweird.f32 %v1176
    %vm1184 = vmor %vm1182, %vm1183
    %v1185 = vsel %vm1184, %v1176, %v1181
    %v1186 = vrsqrt.pop %v1175
    %v1187 = vmul.f32 %v1186, %v1175
    %v1188 = vmul.f32 %v1187, %v1186
    %v1189 = vmul.f32 0.5, %v1188
    %v1190 = vsub.f32 1.5, %v1189
    %v1191 = vmul.f32 %v1186, %v1190
    %vm1192 = vweird.f32 %v1175
    %vm1193 = vweird.f32 %v1186
    %vm1194 = vmor %vm1192, %vm1193
    %v1195 = vsel %vm1194, %v1186, %v1191
    %v1196 = vmul.f32 %v1164, %v1185
    %v1197 = vmul.f32 %v1165, %v1195
    %v1198 = vld [vmem:[%s4] sm:$0x1]
    %v1200 = vperm.slane %v1198, 0
    %v1202 = vmul.f32 %v1196, %v1200
    %v1203 = vmul.f32 %v1197, %v1200
    %v1204 = vpack.c.bf16 %v1203, %v1202
    %v1205 = vld [vmem:[#allocation11] sm:$0xff]
    %v1206 = vld [vmem:[#allocation11 + $0x8] sm:$0xff]
    %v1207 = vld [vmem:[#allocation11 + $0x10] sm:$0xff]
    %v1208 = vld [vmem:[#allocation11 + $0x18] sm:$0xff]
    %v1209 = vld [vmem:[#allocation11 + $0x20] sm:$0xff]
    %v1210 = vld [vmem:[#allocation11 + $0x28] sm:$0xff]
    %v1211 = vld [vmem:[#allocation11 + $0x30] sm:$0xff]
    %v1212 = vld [vmem:[#allocation11 + $0x38] sm:$0xff]
    %v1213 = vld [vmem:[#allocation11 + $0x40] sm:$0xff]
    %v1214 = vld [vmem:[#allocation11 + $0x48] sm:$0xff]
    %v1215 = vld [vmem:[#allocation11 + $0x50] sm:$0xff]
    %v1216 = vld [vmem:[#allocation11 + $0x58] sm:$0xff]
    %v1217 = vld [vmem:[#allocation11 + $0x60] sm:$0xff]
    %v1218 = vld [vmem:[#allocation11 + $0x68] sm:$0xff]
    %v1219 = vld [vmem:[#allocation11 + $0x70] sm:$0xff]
    %v1220 = vld [vmem:[#allocation11 + $0x78] sm:$0xff]
    %v1221 = vld [vmem:[#allocation11 + $0x80] sm:$0xff]
    %v1222 = vld [vmem:[#allocation11 + $0x88] sm:$0xff]
    %v1223 = vld [vmem:[#allocation11 + $0x90] sm:$0xff]
    %v1224 = vld [vmem:[#allocation11 + $0x98] sm:$0xff]
    %v1225 = vld [vmem:[#allocation11 + $0xa0] sm:$0xff]
    %v1226 = vld [vmem:[#allocation11 + $0xa8] sm:$0xff]
    %v1227 = vld [vmem:[#allocation11 + $0xb0] sm:$0xff]
    %v1228 = vld [vmem:[#allocation11 + $0xb8] sm:$0xff]
    %v1229 = vld [vmem:[#allocation11 + $0xc0] sm:$0xff]
    %v1230 = vld [vmem:[#allocation11 + $0xc8] sm:$0xff]
    %v1231 = vld [vmem:[#allocation11 + $0xd0] sm:$0xff]
    %v1232 = vld [vmem:[#allocation11 + $0xd8] sm:$0xff]
    %v1233 = vld [vmem:[#allocation11 + $0xe0] sm:$0xff]
    %v1234 = vld [vmem:[#allocation11 + $0xe8] sm:$0xff]
    %v1235 = vld [vmem:[#allocation11 + $0xf0] sm:$0xff]
    %v1236 = vld [vmem:[#allocation11 + $0xf8] sm:$0xff]
    %v1269 = vunpack.c.l.b16 %v1205
    %v1270 = vunpack.c.h.b16 %v1205
    %v1271 = vunpack.c.l.b16 %v1206
    %v1272 = vunpack.c.h.b16 %v1206
    %v1273 = vunpack.c.l.b16 %v1207
    %v1274 = vunpack.c.h.b16 %v1207
    %v1275 = vunpack.c.l.b16 %v1208
    %v1276 = vunpack.c.h.b16 %v1208
    %v1277 = vunpack.c.l.b16 %v1209
    %v1278 = vunpack.c.h.b16 %v1209
    %v1279 = vunpack.c.l.b16 %v1210
    %v1280 = vunpack.c.h.b16 %v1210
    %v1281 = vunpack.c.l.b16 %v1211
    %v1282 = vunpack.c.h.b16 %v1211
    %v1283 = vunpack.c.l.b16 %v1212
    %v1284 = vunpack.c.h.b16 %v1212
    %v1285 = vunpack.c.l.b16 %v1213
    %v1286 = vunpack.c.h.b16 %v1213
    %v1287 = vunpack.c.l.b16 %v1214
    %v1288 = vunpack.c.h.b16 %v1214
    %v1289 = vunpack.c.l.b16 %v1215
    %v1290 = vunpack.c.h.b16 %v1215
    %v1291 = vunpack.c.l.b16 %v1216
    %v1292 = vunpack.c.h.b16 %v1216
    %v1293 = vunpack.c.l.b16 %v1217
    %v1294 = vunpack.c.h.b16 %v1217
    %v1295 = vunpack.c.l.b16 %v1218
    %v1296 = vunpack.c.h.b16 %v1218
    %v1297 = vunpack.c.l.b16 %v1219
    %v1298 = vunpack.c.h.b16 %v1219
    %v1299 = vunpack.c.l.b16 %v1220
    %v1300 = vunpack.c.h.b16 %v1220
    %v1301 = vunpack.c.l.b16 %v1221
    %v1302 = vunpack.c.h.b16 %v1221
    %v1303 = vunpack.c.l.b16 %v1222
    %v1304 = vunpack.c.h.b16 %v1222
    %v1305 = vunpack.c.l.b16 %v1223
    %v1306 = vunpack.c.h.b16 %v1223
    %v1307 = vunpack.c.l.b16 %v1224
    %v1308 = vunpack.c.h.b16 %v1224
    %v1309 = vunpack.c.l.b16 %v1225
    %v1310 = vunpack.c.h.b16 %v1225
    %v1311 = vunpack.c.l.b16 %v1226
    %v1312 = vunpack.c.h.b16 %v1226
    %v1313 = vunpack.c.l.b16 %v1227
    %v1314 = vunpack.c.h.b16 %v1227
    %v1315 = vunpack.c.l.b16 %v1228
    %v1316 = vunpack.c.h.b16 %v1228
    %v1317 = vunpack.c.l.b16 %v1229
    %v1318 = vunpack.c.h.b16 %v1229
    %v1319 = vunpack.c.l.b16 %v1230
    %v1320 = vunpack.c.h.b16 %v1230
    %v1321 = vunpack.c.l.b16 %v1231
    %v1322 = vunpack.c.h.b16 %v1231
    %v1323 = vunpack.c.l.b16 %v1232
    %v1324 = vunpack.c.h.b16 %v1232
    %v1325 = vunpack.c.l.b16 %v1233
    %v1326 = vunpack.c.h.b16 %v1233
    %v1327 = vunpack.c.l.b16 %v1234
    %v1328 = vunpack.c.h.b16 %v1234
    %v1329 = vunpack.c.l.b16 %v1235
    %v1330 = vunpack.c.h.b16 %v1235
    %v1331 = vunpack.c.l.b16 %v1236
    %v1332 = vunpack.c.h.b16 %v1236
    %v1333 = vpack.c.b16 %v1273, %v1269
    %v1334 = vpack.c.b16 %v1274, %v1270
    %v1335 = vpack.c.b16 %v1275, %v1271
    %v1336 = vpack.c.b16 %v1276, %v1272
    %v1337 = vpack.c.b16 %v1281, %v1277
    %v1338 = vpack.c.b16 %v1282, %v1278
    %v1339 = vpack.c.b16 %v1283, %v1279
    %v1340 = vpack.c.b16 %v1284, %v1280
    %v1341 = vpack.c.b16 %v1289, %v1285
    %v1342 = vpack.c.b16 %v1290, %v1286
    %v1343 = vpack.c.b16 %v1291, %v1287
    %v1344 = vpack.c.b16 %v1292, %v1288
    %v1345 = vpack.c.b16 %v1297, %v1293
    %v1346 = vpack.c.b16 %v1298, %v1294
    %v1347 = vpack.c.b16 %v1299, %v1295
    %v1348 = vpack.c.b16 %v1300, %v1296
    %v1349 = vpack.c.b16 %v1305, %v1301
    %v1350 = vpack.c.b16 %v1306, %v1302
    %v1351 = vpack.c.b16 %v1307, %v1303
    %v1352 = vpack.c.b16 %v1308, %v1304
    %v1353 = vpack.c.b16 %v1313, %v1309
    %v1354 = vpack.c.b16 %v1314, %v1310
    %v1355 = vpack.c.b16 %v1315, %v1311
    %v1356 = vpack.c.b16 %v1316, %v1312
    %v1357 = vpack.c.b16 %v1321, %v1317
    %v1358 = vpack.c.b16 %v1322, %v1318
    %v1359 = vpack.c.b16 %v1323, %v1319
    %v1360 = vpack.c.b16 %v1324, %v1320
    %v1361 = vpack.c.b16 %v1329, %v1325
    %v1362 = vpack.c.b16 %v1330, %v1326
    %v1363 = vpack.c.b16 %v1331, %v1327
    %v1364 = vpack.c.b16 %v1332, %v1328
    %1397 = vmatpush.bf16.msra.mxu0 %v1361
    %1398 = vmatpush.bf16.msra.mxu0 %v1357
    %1399 = vmatpush.bf16.msra.mxu0 %v1353
    %1400 = vmatpush.bf16.msra.mxu0 %v1349
    %1401 = vmatpush.bf16.msra.mxu0 %v1345
    %1402 = vmatpush.bf16.msra.mxu0 %v1341
    %1403 = vmatpush.bf16.msra.mxu0 %v1337
    %1404 = vmatpush.bf16.msra.mxu0 %v1333
    %1405 = vmatmul.bf16.gmra.mxu0 %v1204
    %v1406 = vpop.f32.mrf.mxu0
    %v1407 = vadd.f32 0.0, %v1406
    %v1408 = vpop.f32.mrf.mxu0
    %v1409 = vadd.f32 0.0, %v1408
    %1410 = vdwg.mxu0
    %1411 = vmatpush.bf16.msra.mxu0 %v1362
    %1412 = vmatpush.bf16.msra.mxu0 %v1358
    %1413 = vmatpush.bf16.msra.mxu0 %v1354
    %1414 = vmatpush.bf16.msra.mxu0 %v1350
    %1415 = vmatpush.bf16.msra.mxu0 %v1346
    %1416 = vmatpush.bf16.msra.mxu0 %v1342
    %1417 = vmatpush.bf16.msra.mxu0 %v1338
    %1418 = vmatpush.bf16.msra.mxu0 %v1334
    %1419 = vmatmul.bf16.gmra.mxu0 %v1204
    %v1420 = vpop.f32.mrf.mxu0
    %v1421 = vadd.f32 0.0, %v1420
    %v1422 = vpop.f32.mrf.mxu0
    %v1423 = vadd.f32 0.0, %v1422
    %1424 = vdwg.mxu0
    %1425 = vmatpush.bf16.msra.mxu0 %v1363
    %1426 = vmatpush.bf16.msra.mxu0 %v1359
    %1427 = vmatpush.bf16.msra.mxu0 %v1355
    %1428 = vmatpush.bf16.msra.mxu0 %v1351
    %1429 = vmatpush.bf16.msra.mxu0 %v1347
    %1430 = vmatpush.bf16.msra.mxu0 %v1343
    %1431 = vmatpush.bf16.msra.mxu0 %v1339
    %1432 = vmatpush.bf16.msra.mxu0 %v1335
    %1433 = vmatmul.bf16.gmra.mxu0 %v1204
    %v1434 = vpop.f32.mrf.mxu0
    %v1435 = vadd.f32 0.0, %v1434
    %v1436 = vpop.f32.mrf.mxu0
    %v1437 = vadd.f32 0.0, %v1436
    %1438 = vdwg.mxu0
    %1439 = vmatpush.bf16.msra.mxu0 %v1364
    %1440 = vmatpush.bf16.msra.mxu0 %v1360
    %1441 = vmatpush.bf16.msra.mxu0 %v1356
    %1442 = vmatpush.bf16.msra.mxu0 %v1352
    %1443 = vmatpush.bf16.msra.mxu0 %v1348
    %1444 = vmatpush.bf16.msra.mxu0 %v1344
    %1445 = vmatpush.bf16.msra.mxu0 %v1340
    %1446 = vmatpush.bf16.msra.mxu0 %v1336
    %1447 = vmatmul.bf16.gmra.mxu0 %v1204
    %v1448 = vpop.f32.mrf.mxu0
    %v1449 = vadd.f32 0.0, %v1448
    %v1450 = vpop.f32.mrf.mxu0
    %v1451 = vadd.f32 0.0, %v1450
    %1452 = vdwg.mxu0
    %v1453 = vmul.f32 %v1407, 0.5
    %v1454 = vmul.f32 %v1421, 0.5
    %v1455 = vmul.f32 %v1409, 0.5
    %v1456 = vmul.f32 %v1423, 0.5
    %v1457 = vtanh.pop %v1453
    %v1458 = vtanh.pop %v1454
    %v1459 = vtanh.pop %v1455
    %v1460 = vtanh.pop %v1456
    %v1461 = vadd.f32 %v1457, 1.0
    %v1462 = vadd.f32 %v1458, 1.0
    %v1463 = vadd.f32 %v1459, 1.0
    %v1464 = vadd.f32 %v1460, 1.0
    %v1465 = vmul.f32 %v1461, 0.5
    %v1466 = vmul.f32 %v1462, 0.5
    %v1467 = vmul.f32 %v1463, 0.5
    %v1468 = vmul.f32 %v1464, 0.5
    %v1469 = vmul.f32 %v1407, %v1465
    %v1470 = vmul.f32 %v1421, %v1466
    %v1471 = vmul.f32 %v1409, %v1467
    %v1472 = vmul.f32 %v1423, %v1468
    %v1473 = vmul.f32 %v1469, %v1435
    %v1474 = vmul.f32 %v1470, %v1449
    %v1475 = vmul.f32 %v1471, %v1437
    %v1476 = vmul.f32 %v1472, %v1451
    %v1477 = vpack.c.bf16 %v1475, %v1473
    %v1478 = vpack.c.bf16 %v1476, %v1474
    %v1479 = vld [vmem:[#allocation13] sm:$0xf]
    %v1480 = vld [vmem:[#allocation13 + $0x4] sm:$0xf]
    %v1481 = vld [vmem:[#allocation13 + $0x8] sm:$0xf]
    %v1482 = vld [vmem:[#allocation13 + $0xc] sm:$0xf]
    %v1483 = vld [vmem:[#allocation13 + $0x10] sm:$0xf]
    %v1484 = vld [vmem:[#allocation13 + $0x14] sm:$0xf]
    %v1485 = vld [vmem:[#allocation13 + $0x18] sm:$0xf]
    %v1486 = vld [vmem:[#allocation13 + $0x1c] sm:$0xf]
    %v1487 = vld [vmem:[#allocation13 + $0x20] sm:$0xf]
    %v1488 = vld [vmem:[#allocation13 + $0x24] sm:$0xf]
    %v1489 = vld [vmem:[#allocation13 + $0x28] sm:$0xf]
    %v1490 = vld [vmem:[#allocation13 + $0x2c] sm:$0xf]
    %v1491 = vld [vmem:[#allocation13 + $0x30] sm:$0xf]
    %v1492 = vld [vmem:[#allocation13 + $0x34] sm:$0xf]
    %v1493 = vld [vmem:[#allocation13 + $0x38] sm:$0xf]
    %v1494 = vld [vmem:[#allocation13 + $0x3c] sm:$0xf]
    %v1495 = vld [vmem:[#allocation13 + $0x40] sm:$0xf]
    %v1496 = vld [vmem:[#allocation13 + $0x44] sm:$0xf]
    %v1497 = vld [vmem:[#allocation13 + $0x48] sm:$0xf]
    %v1498 = vld [vmem:[#allocation13 + $0x4c] sm:$0xf]
    %v1499 = vld [vmem:[#allocation13 + $0x50] sm:$0xf]
    %v1500 = vld [vmem:[#allocation13 + $0x54] sm:$0xf]
    %v1501 = vld [vmem:[#allocation13 + $0x58] sm:$0xf]
    %v1502 = vld [vmem:[#allocation13 + $0x5c] sm:$0xf]
    %v1503 = vld [vmem:[#allocation13 + $0x60] sm:$0xf]
    %v1504 = vld [vmem:[#allocation13 + $0x64] sm:$0xf]
    %v1505 = vld [vmem:[#allocation13 + $0x68] sm:$0xf]
    %v1506 = vld [vmem:[#allocation13 + $0x6c] sm:$0xf]
    %v1507 = vld [vmem:[#allocation13 + $0x70] sm:$0xf]
    %v1508 = vld [vmem:[#allocation13 + $0x74] sm:$0xf]
    %v1509 = vld [vmem:[#allocation13 + $0x78] sm:$0xf]
    %v1510 = vld [vmem:[#allocation13 + $0x7c] sm:$0xf]
    %v1543 = vunpack.c.l.b16 %v1479
    %v1544 = vunpack.c.l.b16 %v1480
    %v1545 = vunpack.c.l.b16 %v1481
    %v1546 = vunpack.c.l.b16 %v1482
    %v1547 = vunpack.c.l.b16 %v1483
    %v1548 = vunpack.c.l.b16 %v1484
    %v1549 = vunpack.c.l.b16 %v1485
    %v1550 = vunpack.c.l.b16 %v1486
    %v1551 = vunpack.c.l.b16 %v1487
    %v1552 = vunpack.c.l.b16 %v1488
    %v1553 = vunpack.c.l.b16 %v1489
    %v1554 = vunpack.c.l.b16 %v1490
    %v1555 = vunpack.c.l.b16 %v1491
    %v1556 = vunpack.c.l.b16 %v1492
    %v1557 = vunpack.c.l.b16 %v1493
    %v1558 = vunpack.c.l.b16 %v1494
    %v1559 = vunpack.c.l.b16 %v1495
    %v1560 = vunpack.c.l.b16 %v1496
    %v1561 = vunpack.c.l.b16 %v1497
    %v1562 = vunpack.c.l.b16 %v1498
    %v1563 = vunpack.c.l.b16 %v1499
    %v1564 = vunpack.c.l.b16 %v1500
    %v1565 = vunpack.c.l.b16 %v1501
    %v1566 = vunpack.c.l.b16 %v1502
    %v1567 = vunpack.c.l.b16 %v1503
    %v1568 = vunpack.c.l.b16 %v1504
    %v1569 = vunpack.c.l.b16 %v1505
    %v1570 = vunpack.c.l.b16 %v1506
    %v1571 = vunpack.c.l.b16 %v1507
    %v1572 = vunpack.c.l.b16 %v1508
    %v1573 = vunpack.c.l.b16 %v1509
    %v1574 = vunpack.c.l.b16 %v1510
    %v1575 = vpack.c.b16 %v1544, %v1543
    %v1576 = vpack.c.b16 %v1546, %v1545
    %v1577 = vpack.c.b16 %v1548, %v1547
    %v1578 = vpack.c.b16 %v1550, %v1549
    %v1579 = vpack.c.b16 %v1552, %v1551
    %v1580 = vpack.c.b16 %v1554, %v1553
    %v1581 = vpack.c.b16 %v1556, %v1555
    %v1582 = vpack.c.b16 %v1558, %v1557
    %v1583 = vpack.c.b16 %v1560, %v1559
    %v1584 = vpack.c.b16 %v1562, %v1561
    %v1585 = vpack.c.b16 %v1564, %v1563
    %v1586 = vpack.c.b16 %v1566, %v1565
    %v1587 = vpack.c.b16 %v1568, %v1567
    %v1588 = vpack.c.b16 %v1570, %v1569
    %v1589 = vpack.c.b16 %v1572, %v1571
    %v1590 = vpack.c.b16 %v1574, %v1573
    %1607 = vmatpush.bf16.msra.mxu0 %v1582
    %1608 = vmatpush.bf16.msra.mxu0 %v1581
    %1609 = vmatpush.bf16.msra.mxu0 %v1580
    %1610 = vmatpush.bf16.msra.mxu0 %v1579
    %1611 = vmatpush.bf16.msra.mxu0 %v1578
    %1612 = vmatpush.bf16.msra.mxu0 %v1577
    %1613 = vmatpush.bf16.msra.mxu0 %v1576
    %1614 = vmatpush.bf16.msra.mxu0 %v1575
    %1615 = vmatmul.bf16.gmra.mxu0 %v1477
    %v1616 = vpop.f32.mrf.mxu0
    %v1617 = vadd.f32 %v1164, %v1616
    %v1618 = vpop.f32.mrf.mxu0
    %v1619 = vadd.f32 %v1165, %v1618
    %1620 = vdwg.mxu0
    %1621 = vmatpush.bf16.msra.mxu0 %v1590
    %1622 = vmatpush.bf16.msra.mxu0 %v1589
    %1623 = vmatpush.bf16.msra.mxu0 %v1588
    %1624 = vmatpush.bf16.msra.mxu0 %v1587
    %1625 = vmatpush.bf16.msra.mxu0 %v1586
    %1626 = vmatpush.bf16.msra.mxu0 %v1585
    %1627 = vmatpush.bf16.msra.mxu0 %v1584
    %1628 = vmatpush.bf16.msra.mxu0 %v1583
    %1629 = vmatmul.bf16.gmra.mxu0 %v1478
    %v1630 = vpop.f32.mrf.mxu0
    %v1631 = vadd.f32 %v1617, %v1630
    %v1632 = vpop.f32.mrf.mxu0
    %v1633 = vadd.f32 %v1619, %v1632
    %1634 = vdwg.mxu0
    %1635 = vst [vmem:[#allocation14] sm:$0xff] %v1631
    %1636 = vst [vmem:[#allocation14 + $0x8] sm:$0xff] %v1633
    // Predicated region
    $region66: #{tpu_custom_call.1} parent=1 // pred_check
      _
    $region67: #{tpu_custom_call.1} parent=1 // pred_check_branch
      %1638 = sbr.rel (0) target = $region69
    $region68: #{tpu_custom_call.1} parent=1 // pred_region
      %1640 = vsyncadd [#allocation4], 0
      %s1641 = sshll.u32 [#allocation14], 4
      %s1642 = int_to_ptr.vmem [resolvable:$true] %s1641
      %s1643 = sshll.u32 %s9, 4
      %s1644 = int_to_ptr.hbm [resolvable:$true] %s1643
      %1649 = dma.vmem_to_hbm [thread:$0]  %s1642, 256, %s1644, [#allocation4], 128, 128, 8
    $region69: #{tpu_custom_call.1} parent=1 // pred_fallthru
      _
    // Predicated region
    $region70: #{tpu_custom_call.1} parent=1 // pred_check
      _
    $region71: #{tpu_custom_call.1} parent=1 // pred_check_branch
      %1651 = sbr.rel (0) target = $region73
    $region72: #{tpu_custom_call.1} parent=1 // pred_region
      %1653 = dma.done [#allocation4], 256
    $region73: #{tpu_custom_call.1} parent=1 // pred_fallthru
      _
    %1654 = vsyncpa [#allocation3], 1
    %1655 = vsyncpa [#allocation6], 1
    %1656 = vsyncpa [#allocation9], 1
    %1657 = vsyncpa [#allocation12], 1
    %1658 = vsyncpa [#allocation4], 1

</llo_original>
